<compile_context>
chip_gen: v5e
topology: v5e:2x2
jax: 0.10.0
libtpu: 0.0.40
codegen_flags: <defaults>
</compile_context>

<pallas_src>
import jax
import jax.numpy as jnp
import numpy as np
from jax.experimental import pallas as pl
from jax.experimental.pallas import tpu as pltpu


def _delay_shift_kernel(maxb_ref, x_ref, b_ref, f_ref, o_ref):
    ns = x_ref.shape[-1]
    max_b = maxb_ref[0]                                   # SMEM scalar

    cdt = jnp.bfloat16 if x_ref.dtype == jnp.bfloat16 else jnp.float32
    x = x_ref[...].astype(cdt)                            # (TN, TM, Ns)
    f = f_ref[...].astype(cdt)[None]                      # (1, TM, 1)

    use_roll = (ns % 128 == 0)
    # Hoisted once per grid step (JAX does not CSE broadcast_in_dim).
    t_idx = (jax.lax.broadcasted_iota(jnp.int32, (1, 1, ns), 2)
             if use_roll else None)

    def shift_right(y, s):
        # out[..., t] = y[..., t - s] for t >= s, else 0   (static s)
        if s >= ns:
            return jnp.zeros_like(y)
        if use_roll:
            # Lane rotation on the XLU slot + one VPU select; no VMEM copies.
            rolled = pltpu.roll(y, shift=s, axis=2)
            return jnp.where(t_idx >= s, rolled, jnp.zeros_like(y))
        # Small / unaligned Ns fallback: static slice + concat.
        return jnp.concatenate(
            [jnp.zeros_like(y[..., :s]), y[..., :ns - s]], axis=2)

    # Fractional 2-tap blend (fused form of (1-f)*x + f*S1(x)); this IS the
    # output when b == 0, and the integer shift composes on top of it:
    #   out = S_b(blend).
    blend = x + f * (shift_right(x, 1) - x)
    o_ref[...] = blend.astype(o_ref.dtype)

    # Integer barrel shifter: static shifts 1, 2, 4, ... selected per neuron by
    # the bits of b.  Each stage is gated on the prefetched scalar max(b), so
    # with the default init (b == 0 everywhere) no stage runs at all.
    # TODO(synk): negative delays (left shifts) are clipped to 0; the module's
    # torch.rand init keeps delay >= 0 so the forward never hits that case.
    b = jnp.clip(b_ref[...][None], 0, ns)                 # (1, TM, 1) int32

    for k in range(max(1, ns.bit_length())):
        s = 1 << k

        @pl.when((max_b >> k) != 0)
        def _stage(s=s):
            y = o_ref[...].astype(cdt)
            o_ref[...] = jnp.where((b & s) != 0, shift_right(y, s), y
                                   ).astype(o_ref.dtype)


def _pick_blocks(n, m, ns, itemsize, target_bytes=2 << 20):
    """Choose (TN, TM): x-block ~target_bytes, TM multiple of 8 (or == M)."""
    rows_budget = max(1, target_bytes // (itemsize * max(1, ns)))
    if m < 8:
        tm = m                                   # full (small) neuron axis
    else:
        tm = min((m // 8) * 8, max(8, (rows_budget // 8) * 8))
    tn = max(1, min(n, rows_budget // max(1, tm)))
    return tn, tm


def _shift_pallas(x_nmt, b, f, max_b):
    """x_nmt: (N, M, Ns); b: (M,1) int32; f: (M,1) float32; max_b: (1,) i32."""
    n, m, ns = x_nmt.shape
    itemsize = jnp.dtype(x_nmt.dtype).itemsize
    tn, tm = _pick_blocks(n, m, ns, itemsize)
    grid = (pl.cdiv(n, tn), pl.cdiv(m, tm))

    block_bytes = tn * tm * ns * itemsize
    # ~double-buffered in + out plus temporaries; raise v5e's 16 MiB scoped
    # default, stay well under v7x's 64 MiB physical VMEM.
    vmem_limit = int(min(48 << 20, max(16 << 20, 10 * block_bytes)))

    return pl.pallas_call(
        _delay_shift_kernel,
        out_shape=jax.ShapeDtypeStruct((n, m, ns), x_nmt.dtype),
        grid_spec=pltpu.PrefetchScalarGridSpec(
            num_scalar_prefetch=1,
            grid=grid,
            in_specs=[
                pl.BlockSpec((tn, tm, ns), lambda i, j, mb: (i, j, 0)),
                pl.BlockSpec((tm, 1), lambda i, j, mb: (j, 0)),
                pl.BlockSpec((tm, 1), lambda i, j, mb: (j, 0)),
            ],
            out_specs=pl.BlockSpec((tn, tm, ns), lambda i, j, mb: (i, j, 0)),
        ),
        compiler_params=pltpu.CompilerParams(
            dimension_semantics=("parallel", "parallel"),
            vmem_limit_bytes=vmem_limit),
    )(max_b, x_nmt, b, f)


class DelayLayerPallas:
    """JAX/Pallas port of slayer._delayLayer (forward only)."""

    def __init__(self, inputSize, Ts, key):
        if isinstance(inputSize, int):
            c, h, w = inputSize, 1, 1
        elif len(inputSize) == 3:
            c, h, w = inputSize
        else:
            raise Exception(
                "inputSize can only be 1 or 3 dimension. It was: {}".format(inputSize))
        # torch.rand((C, H, W)) equivalent, deterministic.
        self.delay = jax.random.uniform(key, (c, h, w), dtype=jnp.float32)
        self.Ts = float(Ts)

    def __call__(self, x):
        n, c, h, w, ns = x.shape
        delay = self.delay
        # Mirrors `self.delay.repeat((1, H, W))`: only needed when the layer was
        # built with an int inputSize (delay is (C,1,1)) but the input has
        # spatial extent.
        if delay.size != c * h * w:
            delay = jnp.tile(delay, (1, h, w))

        shift = delay.reshape(-1).astype(jnp.float32) / jnp.float32(self.Ts)
        b = jnp.floor(shift).astype(jnp.int32)
        f = shift - b.astype(jnp.float32)
        max_b = jnp.clip(jnp.max(b), 0, ns).astype(jnp.int32).reshape(1)

        m = c * h * w
        x_flat = x.reshape(n, m, ns)          # free reshape, no transpose
        # NOTE: if the surrounding model can keep Ns a multiple of 128, output
        # stores become unmasked vst (biggest mem-bound lever); we deliberately
        # do NOT add a wrapper transpose/pad here.
        out = _shift_pallas(x_flat, b.reshape(m, 1), f.reshape(m, 1), max_b)
        return out.reshape(n, c, h, w, ns)


def _shift_ref(x, delay, Ts):
    """Pure-JAX reference of the fractional time-shift semantics."""
    n, c, h, w, ns = x.shape
    if delay.size != c * h * w:
        delay = jnp.tile(delay, (1, h, w))
    shift = delay.astype(jnp.float32) / jnp.float32(Ts)      # (C, H, W)
    b = jnp.floor(shift).astype(jnp.int32)
    f = shift - b.astype(jnp.float32)

    t = jnp.arange(ns)
    src0 = t[None, None, None, :] - b[..., None]             # (C, H, W, Ns)
    src1 = src0 - 1

    def gather(src):
        valid = (src >= 0) & (src < ns)
        srcc = jnp.clip(src, 0, ns - 1)
        idx = jnp.broadcast_to(srcc[None], (n, c, h, w, ns))
        g = jnp.take_along_axis(x, idx, axis=-1)
        return jnp.where(valid[None], g, 0.0)

    return ((1.0 - f)[None, ..., None] * gather(src0)
            + f[None, ..., None] * gather(src1))


if __name__ == "__main__":
    key = jax.random.PRNGKey(0)
    k_d1, k_d2, k_d3, k_x1, k_x2 = jax.random.split(key, 5)

    # Cases 1-3: lane-aligned time axis (Ns = 128) -> pltpu.roll shift path.
    N, C, H, W, Ns = 2, 4, 4, 4, 128
    x = jax.random.normal(k_x1, (N, C, H, W, Ns), dtype=jnp.float32)

    # Case 1: inputSize = (C, H, W), Ts = 1 -> purely fractional shifts (b == 0).
    layer_full = DelayLayerPallas((C, H, W), 1.0, k_d1)
    out_full = jax.block_until_ready(layer_full(x))
    assert out_full.shape == x.shape
    np.testing.assert_allclose(np.asarray(out_full),
                               np.asarray(_shift_ref(x, layer_full.delay, 1.0)),
                               rtol=1e-5, atol=1e-5)

    # Case 2: inputSize = C (int) -> delay (C, 1, 1), tiled over (H, W).
    layer_chan = DelayLayerPallas(C, 1.0, k_d2)
    out_chan = jax.block_until_ready(layer_chan(x))
    np.testing.assert_allclose(np.asarray(out_chan),
                               np.asarray(_shift_ref(x, layer_chan.delay, 1.0)),
                               rtol=1e-5, atol=1e-5)

    # Case 3: Ts < delay -> integer shifts (b in {0..3}), exercises the gated
    # barrel stages on top of the roll path.
    layer_int = DelayLayerPallas((C, H, W), 0.25, k_d1)
    out_int = jax.block_until_ready(layer_int(x))
    np.testing.assert_allclose(np.asarray(out_int),
                               np.asarray(_shift_ref(x, layer_int.delay, 0.25)),
                               rtol=1e-5, atol=1e-5)

    # Case 4: ragged M (= 30, no multiple-of-8 divisor) and small unaligned Ns
    # -> exercises the cdiv partial-block path and the slice-based shift.
    N2, C2, H2, W2, Ns2 = 2, 5, 3, 2, 16
    x2 = jax.random.normal(k_x2, (N2, C2, H2, W2, Ns2), dtype=jnp.float32)
    layer_rag = DelayLayerPallas((C2, H2, W2), 0.25, k_d3)
    out_rag = jax.block_until_ready(layer_rag(x2))
    np.testing.assert_allclose(np.asarray(out_rag),
                               np.asarray(_shift_ref(x2, layer_rag.delay, 0.25)),
                               rtol=1e-5, atol=1e-5)

    print("KERNEL_OK")
</pallas_src>

<mosaic_0001>
module attributes {stable_mosaic.version = 11 : i64} {
  func.func @_delay_shift_kernel(%arg0: i32, %arg1: i32, %arg2: memref<1xi32, #tpu.memory_space<smem>>, %arg3: memref<2x64x128xf32, #tpu.memory_space<vmem>>, %arg4: memref<64x1xi32, #tpu.memory_space<vmem>>, %arg5: memref<64x1xf32, #tpu.memory_space<vmem>>, %arg6: memref<2x64x128xf32, #tpu.memory_space<vmem>>) attributes {dimension_semantics = [#tpu.dimension_semantics<parallel>, #tpu.dimension_semantics<parallel>], iteration_bounds = array<i64: 1, 1>, scalar_prefetch = 1 : i64, scratch_operands = 0 : i64, tpu.core_type = #tpu.core_type<tc>, window_params = [{transform_indices = @transform_0, window_bounds = array<i64: 2, 64, 128>}, {transform_indices = @transform_1, window_bounds = array<i64: 64, 1>}, {transform_indices = @transform_2, window_bounds = array<i64: 64, 1>}, {transform_indices = @transform_3, window_bounds = array<i64: 2, 64, 128>}]} {
    %c0 = arith.constant 0 : index
    %0 = memref.load %arg2[%c0] : memref<1xi32, #tpu.memory_space<smem>>
    %c0_0 = arith.constant 0 : index
    %c0_1 = arith.constant 0 : index
    %c0_2 = arith.constant 0 : index
    %1 = vector.load %arg3[%c0_0, %c0_1, %c0_2] : memref<2x64x128xf32, #tpu.memory_space<vmem>>, vector<2x64x128xf32>
    %c0_3 = arith.constant 0 : index
    %c0_4 = arith.constant 0 : index
    %2 = vector.load %arg5[%c0_3, %c0_4] : memref<64x1xf32, #tpu.memory_space<vmem>>, vector<64x1xf32>
    %3 = vector.shape_cast %2 : vector<64x1xf32> to vector<1x64x1xf32>
    %4 = tpu.iota {dimensions = array<i32: 2>} : vector<1x1x128xi32>
    %c1_i32 = arith.constant 1 : i32
    %5 = tpu.dynamic_rotate %1 by %c1_i32 dim 2 : vector<2x64x128xf32>, i32 -> vector<2x64x128xf32>
    %c1_i32_5 = arith.constant 1 : i32
    %6 = vector.broadcast %c1_i32_5 : i32 to vector<1x1x128xi32>
    %7 = arith.cmpi sge, %4, %6 : vector<1x1x128xi32>
    %cst = arith.constant 0.000000e+00 : f32
    %8 = vector.broadcast %cst : f32 to vector<2x64x128xf32>
    %9 = vector.shape_cast %7 : vector<1x1x128xi1> to vector<1x1x128xi1>
    %10 = vector.broadcast %9 : vector<1x1x128xi1> to vector<2x64x128xi1>
    %11 = arith.select %10, %5, %8 : vector<2x64x128xi1>, vector<2x64x128xf32>
    %12 = arith.subf %11, %1 : vector<2x64x128xf32>
    %13 = vector.broadcast %3 : vector<1x64x1xf32> to vector<2x64x128xf32>
    %14 = arith.mulf %13, %12 : vector<2x64x128xf32>
    %15 = arith.addf %1, %14 : vector<2x64x128xf32>
    %c0_6 = arith.constant 0 : index
    %c0_7 = arith.constant 0 : index
    %c0_8 = arith.constant 0 : index
    %16 = vector.load %arg6[%c0_6, %c0_7, %c0_8] : memref<2x64x128xf32, #tpu.memory_space<vmem>>, vector<2x64x128xf32>
    tpu.vector_store %arg6[%c0_6, %c0_7, %c0_8], %15 {strides = array<i32>} : memref<2x64x128xf32, #tpu.memory_space<vmem>>, vector<2x64x128xf32>,
    %c0_9 = arith.constant 0 : index
    %c0_10 = arith.constant 0 : index
    %17 = vector.load %arg4[%c0_9, %c0_10] : memref<64x1xi32, #tpu.memory_space<vmem>>, vector<64x1xi32>
    %18 = vector.shape_cast %17 : vector<64x1xi32> to vector<1x64x1xi32>
    %c0_i32 = arith.constant 0 : i32
    %c128_i32 = arith.constant 128 : i32
    %19 = vector.broadcast %c0_i32 : i32 to vector<1x64x1xi32>
    %20 = arith.maxsi %19, %18 : vector<1x64x1xi32>
    %21 = vector.broadcast %c128_i32 : i32 to vector<1x64x1xi32>
    %22 = arith.minsi %21, %20 : vector<1x64x1xi32>
    %c0_i32_11 = arith.constant 0 : i32
    %23 = arith.shrsi %0, %c0_i32_11 : i32
    %c0_i32_12 = arith.constant 0 : i32
    %24 = arith.cmpi ne, %23, %c0_i32_12 : i32
    %25 = arith.extui %24 : i1 to i32
    %c0_i32_13 = arith.constant 0 : i32
    %26 = arith.cmpi ne, %25, %c0_i32_13 : i32
    scf.if %26 {
      %c0_29 = arith.constant 0 : index
      %c0_30 = arith.constant 0 : index
      %c0_31 = arith.constant 0 : index
      %55 = vector.load %arg6[%c0_29, %c0_30, %c0_31] : memref<2x64x128xf32, #tpu.memory_space<vmem>>, vector<2x64x128xf32>
      %c1_i32_32 = arith.constant 1 : i32
      %56 = vector.broadcast %c1_i32_32 : i32 to vector<1x64x1xi32>
      %57 = arith.andi %22, %56 : vector<1x64x1xi32>
      %c0_i32_33 = arith.constant 0 : i32
      %58 = vector.broadcast %c0_i32_33 : i32 to vector<1x64x1xi32>
      %59 = arith.cmpi ne, %57, %58 : vector<1x64x1xi32>
      %c1_i32_34 = arith.constant 1 : i32
      %60 = tpu.dynamic_rotate %55 by %c1_i32_34 dim 2 : vector<2x64x128xf32>, i32 -> vector<2x64x128xf32>
      %c1_i32_35 = arith.constant 1 : i32
      %61 = vector.broadcast %c1_i32_35 : i32 to vector<1x1x128xi32>
      %62 = arith.cmpi sge, %4, %61 : vector<1x1x128xi32>
      %cst_36 = arith.constant 0.000000e+00 : f32
      %63 = vector.broadcast %cst_36 : f32 to vector<2x64x128xf32>
      %64 = vector.shape_cast %62 : vector<1x1x128xi1> to vector<1x1x128xi1>
      %65 = vector.broadcast %64 : vector<1x1x128xi1> to vector<2x64x128xi1>
      %66 = arith.select %65, %60, %63 : vector<2x64x128xi1>, vector<2x64x128xf32>
      %67 = vector.shape_cast %59 : vector<1x64x1xi1> to vector<1x64x1xi1>
      %68 = vector.broadcast %67 : vector<1x64x1xi1> to vector<2x64x128xi1>
      %69 = arith.select %68, %66, %55 : vector<2x64x128xi1>, vector<2x64x128xf32>
      %c0_37 = arith.constant 0 : index
      %c0_38 = arith.constant 0 : index
      %c0_39 = arith.constant 0 : index
      %70 = vector.load %arg6[%c0_37, %c0_38, %c0_39] : memref<2x64x128xf32, #tpu.memory_space<vmem>>, vector<2x64x128xf32>
      tpu.vector_store %arg6[%c0_37, %c0_38, %c0_39], %69 {strides = array<i32>} : memref<2x64x128xf32, #tpu.memory_space<vmem>>, vector<2x64x128xf32>,
    } else {
    }
    %c1_i32_14 = arith.constant 1 : i32
    %27 = arith.shrsi %0, %c1_i32_14 : i32
    %c0_i32_15 = arith.constant 0 : i32
    %28 = arith.cmpi ne, %27, %c0_i32_15 : i32
    %29 = arith.extui %28 : i1 to i32
    %c0_i32_16 = arith.constant 0 : i32
    %30 = arith.cmpi ne, %29, %c0_i32_16 : i32
    scf.if %30 {
      %c0_29 = arith.constant 0 : index
      %c0_30 = arith.constant 0 : index
      %c0_31 = arith.constant 0 : index
      %55 = vector.load %arg6[%c0_29, %c0_30, %c0_31] : memref<2x64x128xf32, #tpu.memory_space<vmem>>, vector<2x64x128xf32>
      %c2_i32_32 = arith.constant 2 : i32
      %56 = vector.broadcast %c2_i32_32 : i32 to vector<1x64x1xi32>
      %57 = arith.andi %22, %56 : vector<1x64x1xi32>
      %c0_i32_33 = arith.constant 0 : i32
      %58 = vector.broadcast %c0_i32_33 : i32 to vector<1x64x1xi32>
      %59 = arith.cmpi ne, %57, %58 : vector<1x64x1xi32>
      %c2_i32_34 = arith.constant 2 : i32
      %60 = tpu.dynamic_rotate %55 by %c2_i32_34 dim 2 : vector<2x64x128xf32>, i32 -> vector<2x64x128xf32>
      %c2_i32_35 = arith.constant 2 : i32
      %61 = vector.broadcast %c2_i32_35 : i32 to vector<1x1x128xi32>
      %62 = arith.cmpi sge, %4, %61 : vector<1x1x128xi32>
      %cst_36 = arith.constant 0.000000e+00 : f32
      %63 = vector.broadcast %cst_36 : f32 to vector<2x64x128xf32>
      %64 = vector.shape_cast %62 : vector<1x1x128xi1> to vector<1x1x128xi1>
      %65 = vector.broadcast %64 : vector<1x1x128xi1> to vector<2x64x128xi1>
      %66 = arith.select %65, %60, %63 : vector<2x64x128xi1>, vector<2x64x128xf32>
      %67 = vector.shape_cast %59 : vector<1x64x1xi1> to vector<1x64x1xi1>
      %68 = vector.broadcast %67 : vector<1x64x1xi1> to vector<2x64x128xi1>
      %69 = arith.select %68, %66, %55 : vector<2x64x128xi1>, vector<2x64x128xf32>
      %c0_37 = arith.constant 0 : index
      %c0_38 = arith.constant 0 : index
      %c0_39 = arith.constant 0 : index
      %70 = vector.load %arg6[%c0_37, %c0_38, %c0_39] : memref<2x64x128xf32, #tpu.memory_space<vmem>>, vector<2x64x128xf32>
      tpu.vector_store %arg6[%c0_37, %c0_38, %c0_39], %69 {strides = array<i32>} : memref<2x64x128xf32, #tpu.memory_space<vmem>>, vector<2x64x128xf32>,
    } else {
    }
    %c2_i32 = arith.constant 2 : i32
    %31 = arith.shrsi %0, %c2_i32 : i32
    %c0_i32_17 = arith.constant 0 : i32
    %32 = arith.cmpi ne, %31, %c0_i32_17 : i32
    %33 = arith.extui %32 : i1 to i32
    %c0_i32_18 = arith.constant 0 : i32
    %34 = arith.cmpi ne, %33, %c0_i32_18 : i32
    scf.if %34 {
      %c0_29 = arith.constant 0 : index
      %c0_30 = arith.constant 0 : index
      %c0_31 = arith.constant 0 : index
      %55 = vector.load %arg6[%c0_29, %c0_30, %c0_31] : memref<2x64x128xf32, #tpu.memory_space<vmem>>, vector<2x64x128xf32>
      %c4_i32_32 = arith.constant 4 : i32
      %56 = vector.broadcast %c4_i32_32 : i32 to vector<1x64x1xi32>
      %57 = arith.andi %22, %56 : vector<1x64x1xi32>
      %c0_i32_33 = arith.constant 0 : i32
      %58 = vector.broadcast %c0_i32_33 : i32 to vector<1x64x1xi32>
      %59 = arith.cmpi ne, %57, %58 : vector<1x64x1xi32>
      %c4_i32_34 = arith.constant 4 : i32
      %60 = tpu.dynamic_rotate %55 by %c4_i32_34 dim 2 : vector<2x64x128xf32>, i32 -> vector<2x64x128xf32>
      %c4_i32_35 = arith.constant 4 : i32
      %61 = vector.broadcast %c4_i32_35 : i32 to vector<1x1x128xi32>
      %62 = arith.cmpi sge, %4, %61 : vector<1x1x128xi32>
      %cst_36 = arith.constant 0.000000e+00 : f32
      %63 = vector.broadcast %cst_36 : f32 to vector<2x64x128xf32>
      %64 = vector.shape_cast %62 : vector<1x1x128xi1> to vector<1x1x128xi1>
      %65 = vector.broadcast %64 : vector<1x1x128xi1> to vector<2x64x128xi1>
      %66 = arith.select %65, %60, %63 : vector<2x64x128xi1>, vector<2x64x128xf32>
      %67 = vector.shape_cast %59 : vector<1x64x1xi1> to vector<1x64x1xi1>
      %68 = vector.broadcast %67 : vector<1x64x1xi1> to vector<2x64x128xi1>
      %69 = arith.select %68, %66, %55 : vector<2x64x128xi1>, vector<2x64x128xf32>
      %c0_37 = arith.constant 0 : index
      %c0_38 = arith.constant 0 : index
      %c0_39 = arith.constant 0 : index
      %70 = vector.load %arg6[%c0_37, %c0_38, %c0_39] : memref<2x64x128xf32, #tpu.memory_space<vmem>>, vector<2x64x128xf32>
      tpu.vector_store %arg6[%c0_37, %c0_38, %c0_39], %69 {strides = array<i32>} : memref<2x64x128xf32, #tpu.memory_space<vmem>>, vector<2x64x128xf32>,
    } else {
    }
    %c3_i32 = arith.constant 3 : i32
    %35 = arith.shrsi %0, %c3_i32 : i32
    %c0_i32_19 = arith.constant 0 : i32
    %36 = arith.cmpi ne, %35, %c0_i32_19 : i32
    %37 = arith.extui %36 : i1 to i32
    %c0_i32_20 = arith.constant 0 : i32
    %38 = arith.cmpi ne, %37, %c0_i32_20 : i32
    scf.if %38 {
      %c0_29 = arith.constant 0 : index
      %c0_30 = arith.constant 0 : index
      %c0_31 = arith.constant 0 : index
      %55 = vector.load %arg6[%c0_29, %c0_30, %c0_31] : memref<2x64x128xf32, #tpu.memory_space<vmem>>, vector<2x64x128xf32>
      %c8_i32 = arith.constant 8 : i32
      %56 = vector.broadcast %c8_i32 : i32 to vector<1x64x1xi32>
      %57 = arith.andi %22, %56 : vector<1x64x1xi32>
      %c0_i32_32 = arith.constant 0 : i32
      %58 = vector.broadcast %c0_i32_32 : i32 to vector<1x64x1xi32>
      %59 = arith.cmpi ne, %57, %58 : vector<1x64x1xi32>
      %c8_i32_33 = arith.constant 8 : i32
      %60 = tpu.dynamic_rotate %55 by %c8_i32_33 dim 2 : vector<2x64x128xf32>, i32 -> vector<2x64x128xf32>
      %c8_i32_34 = arith.constant 8 : i32
      %61 = vector.broadcast %c8_i32_34 : i32 to vector<1x1x128xi32>
      %62 = arith.cmpi sge, %4, %61 : vector<1x1x128xi32>
      %cst_35 = arith.constant 0.000000e+00 : f32
      %63 = vector.broadcast %cst_35 : f32 to vector<2x64x128xf32>
      %64 = vector.shape_cast %62 : vector<1x1x128xi1> to vector<1x1x128xi1>
      %65 = vector.broadcast %64 : vector<1x1x128xi1> to vector<2x64x128xi1>
      %66 = arith.select %65, %60, %63 : vector<2x64x128xi1>, vector<2x64x128xf32>
      %67 = vector.shape_cast %59 : vector<1x64x1xi1> to vector<1x64x1xi1>
      %68 = vector.broadcast %67 : vector<1x64x1xi1> to vector<2x64x128xi1>
      %69 = arith.select %68, %66, %55 : vector<2x64x128xi1>, vector<2x64x128xf32>
      %c0_36 = arith.constant 0 : index
      %c0_37 = arith.constant 0 : index
      %c0_38 = arith.constant 0 : index
      %70 = vector.load %arg6[%c0_36, %c0_37, %c0_38] : memref<2x64x128xf32, #tpu.memory_space<vmem>>, vector<2x64x128xf32>
      tpu.vector_store %arg6[%c0_36, %c0_37, %c0_38], %69 {strides = array<i32>} : memref<2x64x128xf32, #tpu.memory_space<vmem>>, vector<2x64x128xf32>,
    } else {
    }
    %c4_i32 = arith.constant 4 : i32
    %39 = arith.shrsi %0, %c4_i32 : i32
    %c0_i32_21 = arith.constant 0 : i32
    %40 = arith.cmpi ne, %39, %c0_i32_21 : i32
    %41 = arith.extui %40 : i1 to i32
    %c0_i32_22 = arith.constant 0 : i32
    %42 = arith.cmpi ne, %41, %c0_i32_22 : i32
    scf.if %42 {
      %c0_29 = arith.constant 0 : index
      %c0_30 = arith.constant 0 : index
      %c0_31 = arith.constant 0 : index
      %55 = vector.load %arg6[%c0_29, %c0_30, %c0_31] : memref<2x64x128xf32, #tpu.memory_space<vmem>>, vector<2x64x128xf32>
      %c16_i32 = arith.constant 16 : i32
      %56 = vector.broadcast %c16_i32 : i32 to vector<1x64x1xi32>
      %57 = arith.andi %22, %56 : vector<1x64x1xi32>
      %c0_i32_32 = arith.constant 0 : i32
      %58 = vector.broadcast %c0_i32_32 : i32 to vector<1x64x1xi32>
      %59 = arith.cmpi ne, %57, %58 : vector<1x64x1xi32>
      %c16_i32_33 = arith.constant 16 : i32
      %60 = tpu.dynamic_rotate %55 by %c16_i32_33 dim 2 : vector<2x64x128xf32>, i32 -> vector<2x64x128xf32>
      %c16_i32_34 = arith.constant 16 : i32
      %61 = vector.broadcast %c16_i32_34 : i32 to vector<1x1x128xi32>
      %62 = arith.cmpi sge, %4, %61 : vector<1x1x128xi32>
      %cst_35 = arith.constant 0.000000e+00 : f32
      %63 = vector.broadcast %cst_35 : f32 to vector<2x64x128xf32>
      %64 = vector.shape_cast %62 : vector<1x1x128xi1> to vector<1x1x128xi1>
      %65 = vector.broadcast %64 : vector<1x1x128xi1> to vector<2x64x128xi1>
      %66 = arith.select %65, %60, %63 : vector<2x64x128xi1>, vector<2x64x128xf32>
      %67 = vector.shape_cast %59 : vector<1x64x1xi1> to vector<1x64x1xi1>
      %68 = vector.broadcast %67 : vector<1x64x1xi1> to vector<2x64x128xi1>
      %69 = arith.select %68, %66, %55 : vector<2x64x128xi1>, vector<2x64x128xf32>
      %c0_36 = arith.constant 0 : index
      %c0_37 = arith.constant 0 : index
      %c0_38 = arith.constant 0 : index
      %70 = vector.load %arg6[%c0_36, %c0_37, %c0_38] : memref<2x64x128xf32, #tpu.memory_space<vmem>>, vector<2x64x128xf32>
      tpu.vector_store %arg6[%c0_36, %c0_37, %c0_38], %69 {strides = array<i32>} : memref<2x64x128xf32, #tpu.memory_space<vmem>>, vector<2x64x128xf32>,
    } else {
    }
    %c5_i32 = arith.constant 5 : i32
    %43 = arith.shrsi %0, %c5_i32 : i32
    %c0_i32_23 = arith.constant 0 : i32
    %44 = arith.cmpi ne, %43, %c0_i32_23 : i32
    %45 = arith.extui %44 : i1 to i32
    %c0_i32_24 = arith.constant 0 : i32
    %46 = arith.cmpi ne, %45, %c0_i32_24 : i32
    scf.if %46 {
      %c0_29 = arith.constant 0 : index
      %c0_30 = arith.constant 0 : index
      %c0_31 = arith.constant 0 : index
      %55 = vector.load %arg6[%c0_29, %c0_30, %c0_31] : memref<2x64x128xf32, #tpu.memory_space<vmem>>, vector<2x64x128xf32>
      %c32_i32 = arith.constant 32 : i32
      %56 = vector.broadcast %c32_i32 : i32 to vector<1x64x1xi32>
      %57 = arith.andi %22, %56 : vector<1x64x1xi32>
      %c0_i32_32 = arith.constant 0 : i32
      %58 = vector.broadcast %c0_i32_32 : i32 to vector<1x64x1xi32>
      %59 = arith.cmpi ne, %57, %58 : vector<1x64x1xi32>
      %c32_i32_33 = arith.constant 32 : i32
      %60 = tpu.dynamic_rotate %55 by %c32_i32_33 dim 2 : vector<2x64x128xf32>, i32 -> vector<2x64x128xf32>
      %c32_i32_34 = arith.constant 32 : i32
      %61 = vector.broadcast %c32_i32_34 : i32 to vector<1x1x128xi32>
      %62 = arith.cmpi sge, %4, %61 : vector<1x1x128xi32>
      %cst_35 = arith.constant 0.000000e+00 : f32
      %63 = vector.broadcast %cst_35 : f32 to vector<2x64x128xf32>
      %64 = vector.shape_cast %62 : vector<1x1x128xi1> to vector<1x1x128xi1>
      %65 = vector.broadcast %64 : vector<1x1x128xi1> to vector<2x64x128xi1>
      %66 = arith.select %65, %60, %63 : vector<2x64x128xi1>, vector<2x64x128xf32>
      %67 = vector.shape_cast %59 : vector<1x64x1xi1> to vector<1x64x1xi1>
      %68 = vector.broadcast %67 : vector<1x64x1xi1> to vector<2x64x128xi1>
      %69 = arith.select %68, %66, %55 : vector<2x64x128xi1>, vector<2x64x128xf32>
      %c0_36 = arith.constant 0 : index
      %c0_37 = arith.constant 0 : index
      %c0_38 = arith.constant 0 : index
      %70 = vector.load %arg6[%c0_36, %c0_37, %c0_38] : memref<2x64x128xf32, #tpu.memory_space<vmem>>, vector<2x64x128xf32>
      tpu.vector_store %arg6[%c0_36, %c0_37, %c0_38], %69 {strides = array<i32>} : memref<2x64x128xf32, #tpu.memory_space<vmem>>, vector<2x64x128xf32>,
    } else {
    }
    %c6_i32 = arith.constant 6 : i32
    %47 = arith.shrsi %0, %c6_i32 : i32
    %c0_i32_25 = arith.constant 0 : i32
    %48 = arith.cmpi ne, %47, %c0_i32_25 : i32
    %49 = arith.extui %48 : i1 to i32
    %c0_i32_26 = arith.constant 0 : i32
    %50 = arith.cmpi ne, %49, %c0_i32_26 : i32
    scf.if %50 {
      %c0_29 = arith.constant 0 : index
      %c0_30 = arith.constant 0 : index
      %c0_31 = arith.constant 0 : index
      %55 = vector.load %arg6[%c0_29, %c0_30, %c0_31] : memref<2x64x128xf32, #tpu.memory_space<vmem>>, vector<2x64x128xf32>
      %c64_i32 = arith.constant 64 : i32
      %56 = vector.broadcast %c64_i32 : i32 to vector<1x64x1xi32>
      %57 = arith.andi %22, %56 : vector<1x64x1xi32>
      %c0_i32_32 = arith.constant 0 : i32
      %58 = vector.broadcast %c0_i32_32 : i32 to vector<1x64x1xi32>
      %59 = arith.cmpi ne, %57, %58 : vector<1x64x1xi32>
      %c64_i32_33 = arith.constant 64 : i32
      %60 = tpu.dynamic_rotate %55 by %c64_i32_33 dim 2 : vector<2x64x128xf32>, i32 -> vector<2x64x128xf32>
      %c64_i32_34 = arith.constant 64 : i32
      %61 = vector.broadcast %c64_i32_34 : i32 to vector<1x1x128xi32>
      %62 = arith.cmpi sge, %4, %61 : vector<1x1x128xi32>
      %cst_35 = arith.constant 0.000000e+00 : f32
      %63 = vector.broadcast %cst_35 : f32 to vector<2x64x128xf32>
      %64 = vector.shape_cast %62 : vector<1x1x128xi1> to vector<1x1x128xi1>
      %65 = vector.broadcast %64 : vector<1x1x128xi1> to vector<2x64x128xi1>
      %66 = arith.select %65, %60, %63 : vector<2x64x128xi1>, vector<2x64x128xf32>
      %67 = vector.shape_cast %59 : vector<1x64x1xi1> to vector<1x64x1xi1>
      %68 = vector.broadcast %67 : vector<1x64x1xi1> to vector<2x64x128xi1>
      %69 = arith.select %68, %66, %55 : vector<2x64x128xi1>, vector<2x64x128xf32>
      %c0_36 = arith.constant 0 : index
      %c0_37 = arith.constant 0 : index
      %c0_38 = arith.constant 0 : index
      %70 = vector.load %arg6[%c0_36, %c0_37, %c0_38] : memref<2x64x128xf32, #tpu.memory_space<vmem>>, vector<2x64x128xf32>
      tpu.vector_store %arg6[%c0_36, %c0_37, %c0_38], %69 {strides = array<i32>} : memref<2x64x128xf32, #tpu.memory_space<vmem>>, vector<2x64x128xf32>,
    } else {
    }
    %c7_i32 = arith.constant 7 : i32
    %51 = arith.shrsi %0, %c7_i32 : i32
    %c0_i32_27 = arith.constant 0 : i32
    %52 = arith.cmpi ne, %51, %c0_i32_27 : i32
    %53 = arith.extui %52 : i1 to i32
    %c0_i32_28 = arith.constant 0 : i32
    %54 = arith.cmpi ne, %53, %c0_i32_28 : i32
    scf.if %54 {
      %c0_29 = arith.constant 0 : index
      %c0_30 = arith.constant 0 : index
      %c0_31 = arith.constant 0 : index
      %55 = vector.load %arg6[%c0_29, %c0_30, %c0_31] : memref<2x64x128xf32, #tpu.memory_space<vmem>>, vector<2x64x128xf32>
      %c128_i32_32 = arith.constant 128 : i32
      %56 = vector.broadcast %c128_i32_32 : i32 to vector<1x64x1xi32>
      %57 = arith.andi %22, %56 : vector<1x64x1xi32>
      %c0_i32_33 = arith.constant 0 : i32
      %58 = vector.broadcast %c0_i32_33 : i32 to vector<1x64x1xi32>
      %59 = arith.cmpi ne, %57, %58 : vector<1x64x1xi32>
      %cst_34 = arith.constant 0.000000e+00 : f32
      %60 = vector.broadcast %cst_34 : f32 to vector<2x64x128xf32>
      %61 = vector.shape_cast %59 : vector<1x64x1xi1> to vector<1x64x1xi1>
      %62 = vector.broadcast %61 : vector<1x64x1xi1> to vector<2x64x128xi1>
      %63 = arith.select %62, %60, %55 : vector<2x64x128xi1>, vector<2x64x128xf32>
      %c0_35 = arith.constant 0 : index
      %c0_36 = arith.constant 0 : index
      %c0_37 = arith.constant 0 : index
      %64 = vector.load %arg6[%c0_35, %c0_36, %c0_37] : memref<2x64x128xf32, #tpu.memory_space<vmem>>, vector<2x64x128xf32>
      tpu.vector_store %arg6[%c0_35, %c0_36, %c0_37], %63 {strides = array<i32>} : memref<2x64x128xf32, #tpu.memory_space<vmem>>, vector<2x64x128xf32>,
    } else {
    }
    return
  }
  func.func @transform_0(%arg0: i32, %arg1: i32, %arg2: memref<1xi32, #tpu.memory_space<smem>>) -> (i32, i32, i32) {
    %c0_i32 = arith.constant 0 : i32
    %c0_i32_0 = arith.constant 0 : i32
    return %arg0, %arg1, %c0_i32 : i32, i32, i32
  }
  func.func @transform_1(%arg0: i32, %arg1: i32, %arg2: memref<1xi32, #tpu.memory_space<smem>>) -> (i32, i32) {
    %c0_i32 = arith.constant 0 : i32
    %c0_i32_0 = arith.constant 0 : i32
    return %arg1, %c0_i32 : i32, i32
  }
  func.func @transform_2(%arg0: i32, %arg1: i32, %arg2: memref<1xi32, #tpu.memory_space<smem>>) -> (i32, i32) {
    %c0_i32 = arith.constant 0 : i32
    %c0_i32_0 = arith.constant 0 : i32
    return %arg1, %c0_i32 : i32, i32
  }
  func.func @transform_3(%arg0: i32, %arg1: i32, %arg2: memref<1xi32, #tpu.memory_space<smem>>) -> (i32, i32, i32) {
    %c0_i32 = arith.constant 0 : i32
    %c0_i32_0 = arith.constant 0 : i32
    return %arg0, %arg1, %c0_i32 : i32, i32, i32
  }
}

</mosaic_0001>

<llo_original>
// kernel: tpu_custom_call.1
$region0: #{tpu_custom_call.1}
  #allocation0 [shape = 'u32[]', space=smem, size = 0x4, offset = 0x4, fixed_abs, tag = 'smem constant byte address 0x4 - core index']
  #allocation1 [shape = 'u32[72,128]{1,0:T(1,128)}', space=vmem, size = 0x9000, scoped, tag = 'internal scratch']
  #allocation2 [shape = 's32[1]{0}', space=sflag, size = 0x4, scoped, tag = 'scoped memory for tpu_custom_call.1']
  #allocation3 [shape = 's32[1]{0:T(128)S(6)}', space=smem, size = 0x200, scoped, tag = 'prefetched SMEM operand 0']
  %s0 = inlined_call_operand.<no memory space> [shape: s32[1], index: 0, kind: input, shape index: {}]
  %s1 = inlined_call_operand.vmem [shape: f32[2,64,128], index: 1, kind: input, shape index: {}]
  %s2 = inlined_call_operand.vmem [shape: s32[64,1], index: 2, kind: input, shape index: {}]
  %s3 = inlined_call_operand.vmem [shape: f32[64,1], index: 3, kind: input, shape index: {}]
  %s4 = inlined_call_operand.hbm [shape: f32[2,64,128], index: 4, kind: output, shape index: {}]
  %s5 = sld [smem:[#allocation0]]
  $region54: #{tpu_custom_call.1} parent=0
    _
  %s7 = ssub.s32 1, %s5
  %s8 = scalar_select 0, %s7, %s5
  %9 = sst [smem:[#allocation3]] %s0
  $region1: #{tpu_custom_call.1} parent=0
    #allocation4 [shape = 'u8[65536]{0}', space=vmem, size = 0x10000, scoped, tag = 'output window, operand 0, single buffered']
    #allocation5 [shape = 's32[1]{0}', space=sflag, size = 0x4, scoped, tag = 'scoped memory for tpu_custom_call.1']
    %10 = vsyncpa [#allocation5], 0
    // Predicated region
    $region2: #{tpu_custom_call.1} parent=1 // pred_check
      _
    $region3: #{tpu_custom_call.1} parent=1 // pred_check_branch
      %12 = sbr.rel (0) target = $region5
    $region4: #{tpu_custom_call.1} parent=1 // pred_region
      _
    $region5: #{tpu_custom_call.1} parent=1 // pred_fallthru
      _
    // Predicated region
    $region6: #{tpu_custom_call.1} parent=1 // pred_check
      _
    $region7: #{tpu_custom_call.1} parent=1 // pred_check_branch
      %14 = sbr.rel (0) target = $region9
    $region8: #{tpu_custom_call.1} parent=1 // pred_region
      _
    $region9: #{tpu_custom_call.1} parent=1 // pred_fallthru
      _
    // Predicated region
    $region10: #{tpu_custom_call.1} parent=1 // pred_check
      _
    $region11: #{tpu_custom_call.1} parent=1 // pred_check_branch
      %16 = sbr.rel (0) target = $region13
    $region12: #{tpu_custom_call.1} parent=1 // pred_region
      _
    $region13: #{tpu_custom_call.1} parent=1 // pred_fallthru
      _
    %s17 = sld [smem:[#allocation3]]
    %v18 = vld [vmem:[%s1] sm:$0xff]
    %v19 = vld [vmem:[%s1 + $0x8] sm:$0xff]
    %v20 = vld [vmem:[%s1 + $0x10] sm:$0xff]
    %v21 = vld [vmem:[%s1 + $0x18] sm:$0xff]
    %v22 = vld [vmem:[%s1 + $0x20] sm:$0xff]
    %v23 = vld [vmem:[%s1 + $0x28] sm:$0xff]
    %v24 = vld [vmem:[%s1 + $0x30] sm:$0xff]
    %v25 = vld [vmem:[%s1 + $0x38] sm:$0xff]
    %v26 = vld [vmem:[%s1 + $0x40] sm:$0xff]
    %v27 = vld [vmem:[%s1 + $0x48] sm:$0xff]
    %v28 = vld [vmem:[%s1 + $0x50] sm:$0xff]
    %v29 = vld [vmem:[%s1 + $0x58] sm:$0xff]
    %v30 = vld [vmem:[%s1 + $0x60] sm:$0xff]
    %v31 = vld [vmem:[%s1 + $0x68] sm:$0xff]
    %v32 = vld [vmem:[%s1 + $0x70] sm:$0xff]
    %v33 = vld [vmem:[%s1 + $0x78] sm:$0xff]
    %v34 = vld [vmem:[%s3] sm:$0xff]
    %v35 = vld [vmem:[%s3 + $0x8] sm:$0xff]
    %v36 = vld [vmem:[%s3 + $0x10] sm:$0xff]
    %v37 = vld [vmem:[%s3 + $0x18] sm:$0xff]
    %v38 = vld [vmem:[%s3 + $0x20] sm:$0xff]
    %v39 = vld [vmem:[%s3 + $0x28] sm:$0xff]
    %v40 = vld [vmem:[%s3 + $0x30] sm:$0xff]
    %v41 = vld [vmem:[%s3 + $0x38] sm:$0xff]
    %v42 = vlaneseq
    %v43 = vand.u32 %v42, 127
    %44 = vrot.lane.b32.xlu0 %v18, 1
    %v45 = vpop.permute.xlu0 %44
    %46 = vrot.lane.b32.xlu0 %v19, 1
    %v47 = vpop.permute.xlu0 %46
    %48 = vrot.lane.b32.xlu0 %v20, 1
    %v49 = vpop.permute.xlu0 %48
    %50 = vrot.lane.b32.xlu0 %v21, 1
    %v51 = vpop.permute.xlu0 %50
    %52 = vrot.lane.b32.xlu0 %v22, 1
    %v53 = vpop.permute.xlu0 %52
    %54 = vrot.lane.b32.xlu0 %v23, 1
    %v55 = vpop.permute.xlu0 %54
    %56 = vrot.lane.b32.xlu0 %v24, 1
    %v57 = vpop.permute.xlu0 %56
    %58 = vrot.lane.b32.xlu0 %v25, 1
    %v59 = vpop.permute.xlu0 %58
    %60 = vrot.lane.b32.xlu0 %v26, 1
    %v61 = vpop.permute.xlu0 %60
    %62 = vrot.lane.b32.xlu0 %v27, 1
    %v63 = vpop.permute.xlu0 %62
    %64 = vrot.lane.b32.xlu0 %v28, 1
    %v65 = vpop.permute.xlu0 %64
    %66 = vrot.lane.b32.xlu0 %v29, 1
    %v67 = vpop.permute.xlu0 %66
    %68 = vrot.lane.b32.xlu0 %v30, 1
    %v69 = vpop.permute.xlu0 %68
    %70 = vrot.lane.b32.xlu0 %v31, 1
    %v71 = vpop.permute.xlu0 %70
    %72 = vrot.lane.b32.xlu0 %v32, 1
    %v73 = vpop.permute.xlu0 %72
    %74 = vrot.lane.b32.xlu0 %v33, 1
    %v75 = vpop.permute.xlu0 %74
    %vm76 = vcmp.ge.s32.totalorder %v43, 1
    %v77 = vsel %vm76, 1, 0
    %vm78 = vcmp.eq.s32.totalorder %v77, 1
    %v79 = vsel %vm78, %v45, 0.0
    %v80 = vsel %vm78, %v47, 0.0
    %v81 = vsel %vm78, %v49, 0.0
    %v82 = vsel %vm78, %v51, 0.0
    %v83 = vsel %vm78, %v53, 0.0
    %v84 = vsel %vm78, %v55, 0.0
    %v85 = vsel %vm78, %v57, 0.0
    %v86 = vsel %vm78, %v59, 0.0
    %v87 = vsel %vm78, %v61, 0.0
    %v88 = vsel %vm78, %v63, 0.0
    %v89 = vsel %vm78, %v65, 0.0
    %v90 = vsel %vm78, %v67, 0.0
    %v91 = vsel %vm78, %v69, 0.0
    %v92 = vsel %vm78, %v71, 0.0
    %v93 = vsel %vm78, %v73, 0.0
    %v94 = vsel %vm78, %v75, 0.0
    %v95 = vsub.f32 %v79, %v18
    %v96 = vsub.f32 %v80, %v19
    %v97 = vsub.f32 %v81, %v20
    %v98 = vsub.f32 %v82, %v21
    %v99 = vsub.f32 %v83, %v22
    %v100 = vsub.f32 %v84, %v23
    %v101 = vsub.f32 %v85, %v24
    %v102 = vsub.f32 %v86, %v25
    %v103 = vsub.f32 %v87, %v26
    %v104 = vsub.f32 %v88, %v27
    %v105 = vsub.f32 %v89, %v28
    %v106 = vsub.f32 %v90, %v29
    %v107 = vsub.f32 %v91, %v30
    %v108 = vsub.f32 %v92, %v31
    %v109 = vsub.f32 %v93, %v32
    %v110 = vsub.f32 %v94, %v33
    %112 = vset.pattern.permute.xlu0 0
    %113 = vperm.xlu0 %112, %v34
    %v114 = vpop.permute.xlu0 %113
    %117 = vset.pattern.permute.xlu0 0
    %118 = vperm.xlu0 %117, %v35
    %v119 = vpop.permute.xlu0 %118
    %122 = vset.pattern.permute.xlu0 0
    %123 = vperm.xlu0 %122, %v36
    %v124 = vpop.permute.xlu0 %123
    %127 = vset.pattern.permute.xlu0 0
    %128 = vperm.xlu0 %127, %v37
    %v129 = vpop.permute.xlu0 %128
    %132 = vset.pattern.permute.xlu0 0
    %133 = vperm.xlu0 %132, %v38
    %v134 = vpop.permute.xlu0 %133
    %137 = vset.pattern.permute.xlu0 0
    %138 = vperm.xlu0 %137, %v39
    %v139 = vpop.permute.xlu0 %138
    %142 = vset.pattern.permute.xlu0 0
    %143 = vperm.xlu0 %142, %v40
    %v144 = vpop.permute.xlu0 %143
    %147 = vset.pattern.permute.xlu0 0
    %148 = vperm.xlu0 %147, %v41
    %v149 = vpop.permute.xlu0 %148
    %v151 = vmul.f32 %v114, %v95
    %v152 = vmul.f32 %v119, %v96
    %v153 = vmul.f32 %v124, %v97
    %v154 = vmul.f32 %v129, %v98
    %v155 = vmul.f32 %v134, %v99
    %v156 = vmul.f32 %v139, %v100
    %v157 = vmul.f32 %v144, %v101
    %v158 = vmul.f32 %v149, %v102
    %v159 = vmul.f32 %v114, %v103
    %v160 = vmul.f32 %v119, %v104
    %v161 = vmul.f32 %v124, %v105
    %v162 = vmul.f32 %v129, %v106
    %v163 = vmul.f32 %v134, %v107
    %v164 = vmul.f32 %v139, %v108
    %v165 = vmul.f32 %v144, %v109
    %v166 = vmul.f32 %v149, %v110
    %v167 = vadd.f32 %v18, %v151
    %v168 = vadd.f32 %v19, %v152
    %v169 = vadd.f32 %v20, %v153
    %v170 = vadd.f32 %v21, %v154
    %v171 = vadd.f32 %v22, %v155
    %v172 = vadd.f32 %v23, %v156
    %v173 = vadd.f32 %v24, %v157
    %v174 = vadd.f32 %v25, %v158
    %v175 = vadd.f32 %v26, %v159
    %v176 = vadd.f32 %v27, %v160
    %v177 = vadd.f32 %v28, %v161
    %v178 = vadd.f32 %v29, %v162
    %v179 = vadd.f32 %v30, %v163
    %v180 = vadd.f32 %v31, %v164
    %v181 = vadd.f32 %v32, %v165
    %v182 = vadd.f32 %v33, %v166
    %183 = vst [vmem:[#allocation4] sm:$0xff] %v167
    %184 = vst [vmem:[#allocation4 + $0x8] sm:$0xff] %v168
    %185 = vst [vmem:[#allocation4 + $0x10] sm:$0xff] %v169
    %186 = vst [vmem:[#allocation4 + $0x18] sm:$0xff] %v170
    %187 = vst [vmem:[#allocation4 + $0x20] sm:$0xff] %v171
    %188 = vst [vmem:[#allocation4 + $0x28] sm:$0xff] %v172
    %189 = vst [vmem:[#allocation4 + $0x30] sm:$0xff] %v173
    %190 = vst [vmem:[#allocation4 + $0x38] sm:$0xff] %v174
    %191 = vst [vmem:[#allocation4 + $0x40] sm:$0xff] %v175
    %192 = vst [vmem:[#allocation4 + $0x48] sm:$0xff] %v176
    %193 = vst [vmem:[#allocation4 + $0x50] sm:$0xff] %v177
    %194 = vst [vmem:[#allocation4 + $0x58] sm:$0xff] %v178
    %195 = vst [vmem:[#allocation4 + $0x60] sm:$0xff] %v179
    %196 = vst [vmem:[#allocation4 + $0x68] sm:$0xff] %v180
    %197 = vst [vmem:[#allocation4 + $0x70] sm:$0xff] %v181
    %198 = vst [vmem:[#allocation4 + $0x78] sm:$0xff] %v182
    %v199 = vld [vmem:[%s2] sm:$0xff]
    %v200 = vld [vmem:[%s2 + $0x8] sm:$0xff]
    %v201 = vld [vmem:[%s2 + $0x10] sm:$0xff]
    %v202 = vld [vmem:[%s2 + $0x18] sm:$0xff]
    %v203 = vld [vmem:[%s2 + $0x20] sm:$0xff]
    %v204 = vld [vmem:[%s2 + $0x28] sm:$0xff]
    %v205 = vld [vmem:[%s2 + $0x30] sm:$0xff]
    %v206 = vld [vmem:[%s2 + $0x38] sm:$0xff]
    %vm207 = vcmp.gt.s32.totalorder %v199, 0
    %v208 = vsel %vm207, %v199, 0
    %vm209 = vcmp.gt.s32.totalorder %v200, 0
    %v210 = vsel %vm209, %v200, 0
    %vm211 = vcmp.gt.s32.totalorder %v201, 0
    %v212 = vsel %vm211, %v201, 0
    %vm213 = vcmp.gt.s32.totalorder %v202, 0
    %v214 = vsel %vm213, %v202, 0
    %vm215 = vcmp.gt.s32.totalorder %v203, 0
    %v216 = vsel %vm215, %v203, 0
    %vm217 = vcmp.gt.s32.totalorder %v204, 0
    %v218 = vsel %vm217, %v204, 0
    %vm219 = vcmp.gt.s32.totalorder %v205, 0
    %v220 = vsel %vm219, %v205, 0
    %vm221 = vcmp.gt.s32.totalorder %v206, 0
    %v222 = vsel %vm221, %v206, 0
    %vm223 = vcmp.lt.s32.totalorder %v208, 128
    %v224 = vsel %vm223, %v208, 128
    %vm225 = vcmp.lt.s32.totalorder %v210, 128
    %v226 = vsel %vm225, %v210, 128
    %vm227 = vcmp.lt.s32.totalorder %v212, 128
    %v228 = vsel %vm227, %v212, 128
    %vm229 = vcmp.lt.s32.totalorder %v214, 128
    %v230 = vsel %vm229, %v214, 128
    %vm231 = vcmp.lt.s32.totalorder %v216, 128
    %v232 = vsel %vm231, %v216, 128
    %vm233 = vcmp.lt.s32.totalorder %v218, 128
    %v234 = vsel %vm233, %v218, 128
    %vm235 = vcmp.lt.s32.totalorder %v220, 128
    %v236 = vsel %vm235, %v220, 128
    %vm237 = vcmp.lt.s32.totalorder %v222, 128
    %v238 = vsel %vm237, %v222, 128
    %p239 = scmp.ne.s32.totalorder %s17, 0
    // Predicated region
    $region14: #{tpu_custom_call.1} parent=1 // pred_check
      %p240 = pneg %p239
    $region15: #{tpu_custom_call.1} parent=1 // pred_check_branch
      %242 = sbr.rel (%p240) target = $region17
    $region16: #{tpu_custom_call.1} parent=1 // pred_region
      %v243 = vld [vmem:[#allocation4] sm:$0xff]
      %v244 = vld [vmem:[#allocation4 + $0x8] sm:$0xff]
      %v245 = vld [vmem:[#allocation4 + $0x10] sm:$0xff]
      %v246 = vld [vmem:[#allocation4 + $0x18] sm:$0xff]
      %v247 = vld [vmem:[#allocation4 + $0x20] sm:$0xff]
      %v248 = vld [vmem:[#allocation4 + $0x28] sm:$0xff]
      %v249 = vld [vmem:[#allocation4 + $0x30] sm:$0xff]
      %v250 = vld [vmem:[#allocation4 + $0x38] sm:$0xff]
      %v251 = vld [vmem:[#allocation4 + $0x40] sm:$0xff]
      %v252 = vld [vmem:[#allocation4 + $0x48] sm:$0xff]
      %v253 = vld [vmem:[#allocation4 + $0x50] sm:$0xff]
      %v254 = vld [vmem:[#allocation4 + $0x58] sm:$0xff]
      %v255 = vld [vmem:[#allocation4 + $0x60] sm:$0xff]
      %v256 = vld [vmem:[#allocation4 + $0x68] sm:$0xff]
      %v257 = vld [vmem:[#allocation4 + $0x70] sm:$0xff]
      %v258 = vld [vmem:[#allocation4 + $0x78] sm:$0xff]
      %v259 = vand.u32 %v224, 1
      %v260 = vand.u32 %v226, 1
      %v261 = vand.u32 %v228, 1
      %v262 = vand.u32 %v230, 1
      %v263 = vand.u32 %v232, 1
      %v264 = vand.u32 %v234, 1
      %v265 = vand.u32 %v236, 1
      %v266 = vand.u32 %v238, 1
      %vm267 = vcmp.ne.s32.totalorder %v259, 0
      %vm268 = vcmp.ne.s32.totalorder %v260, 0
      %vm269 = vcmp.ne.s32.totalorder %v261, 0
      %vm270 = vcmp.ne.s32.totalorder %v262, 0
      %vm271 = vcmp.ne.s32.totalorder %v263, 0
      %vm272 = vcmp.ne.s32.totalorder %v264, 0
      %vm273 = vcmp.ne.s32.totalorder %v265, 0
      %vm274 = vcmp.ne.s32.totalorder %v266, 0
      %275 = vrot.lane.b32.xlu0 %v243, 1
      %v276 = vpop.permute.xlu0 %275
      %277 = vrot.lane.b32.xlu0 %v244, 1
      %v278 = vpop.permute.xlu0 %277
      %279 = vrot.lane.b32.xlu0 %v245, 1
      %v280 = vpop.permute.xlu0 %279
      %281 = vrot.lane.b32.xlu0 %v246, 1
      %v282 = vpop.permute.xlu0 %281
      %283 = vrot.lane.b32.xlu0 %v247, 1
      %v284 = vpop.permute.xlu0 %283
      %285 = vrot.lane.b32.xlu0 %v248, 1
      %v286 = vpop.permute.xlu0 %285
      %287 = vrot.lane.b32.xlu0 %v249, 1
      %v288 = vpop.permute.xlu0 %287
      %289 = vrot.lane.b32.xlu0 %v250, 1
      %v290 = vpop.permute.xlu0 %289
      %291 = vrot.lane.b32.xlu0 %v251, 1
      %v292 = vpop.permute.xlu0 %291
      %293 = vrot.lane.b32.xlu0 %v252, 1
      %v294 = vpop.permute.xlu0 %293
      %295 = vrot.lane.b32.xlu0 %v253, 1
      %v296 = vpop.permute.xlu0 %295
      %297 = vrot.lane.b32.xlu0 %v254, 1
      %v298 = vpop.permute.xlu0 %297
      %299 = vrot.lane.b32.xlu0 %v255, 1
      %v300 = vpop.permute.xlu0 %299
      %301 = vrot.lane.b32.xlu0 %v256, 1
      %v302 = vpop.permute.xlu0 %301
      %303 = vrot.lane.b32.xlu0 %v257, 1
      %v304 = vpop.permute.xlu0 %303
      %305 = vrot.lane.b32.xlu0 %v258, 1
      %v306 = vpop.permute.xlu0 %305
      %v307 = vsel %vm78, %v276, 0.0
      %v308 = vsel %vm78, %v278, 0.0
      %v309 = vsel %vm78, %v280, 0.0
      %v310 = vsel %vm78, %v282, 0.0
      %v311 = vsel %vm78, %v284, 0.0
      %v312 = vsel %vm78, %v286, 0.0
      %v313 = vsel %vm78, %v288, 0.0
      %v314 = vsel %vm78, %v290, 0.0
      %v315 = vsel %vm78, %v292, 0.0
      %v316 = vsel %vm78, %v294, 0.0
      %v317 = vsel %vm78, %v296, 0.0
      %v318 = vsel %vm78, %v298, 0.0
      %v319 = vsel %vm78, %v300, 0.0
      %v320 = vsel %vm78, %v302, 0.0
      %v321 = vsel %vm78, %v304, 0.0
      %v322 = vsel %vm78, %v306, 0.0
      %v323 = vsel %vm267, 1, 0
      %v324 = vsel %vm268, 1, 0
      %v325 = vsel %vm269, 1, 0
      %v326 = vsel %vm270, 1, 0
      %v327 = vsel %vm271, 1, 0
      %v328 = vsel %vm272, 1, 0
      %v329 = vsel %vm273, 1, 0
      %v330 = vsel %vm274, 1, 0
      %331 = vset.pattern.permute.xlu0 0
      %332 = vperm.xlu0 %331, %v323
      %v333 = vpop.permute.xlu0 %332
      %334 = vset.pattern.permute.xlu0 0
      %335 = vperm.xlu0 %334, %v324
      %v336 = vpop.permute.xlu0 %335
      %337 = vset.pattern.permute.xlu0 0
      %338 = vperm.xlu0 %337, %v325
      %v339 = vpop.permute.xlu0 %338
      %340 = vset.pattern.permute.xlu0 0
      %341 = vperm.xlu0 %340, %v326
      %v342 = vpop.permute.xlu0 %341
      %343 = vset.pattern.permute.xlu0 0
      %344 = vperm.xlu0 %343, %v327
      %v345 = vpop.permute.xlu0 %344
      %346 = vset.pattern.permute.xlu0 0
      %347 = vperm.xlu0 %346, %v328
      %v348 = vpop.permute.xlu0 %347
      %349 = vset.pattern.permute.xlu0 0
      %350 = vperm.xlu0 %349, %v329
      %v351 = vpop.permute.xlu0 %350
      %352 = vset.pattern.permute.xlu0 0
      %353 = vperm.xlu0 %352, %v330
      %v354 = vpop.permute.xlu0 %353
      %vm355 = vcmp.eq.s32.totalorder %v333, 1
      %vm356 = vcmp.eq.s32.totalorder %v336, 1
      %vm357 = vcmp.eq.s32.totalorder %v339, 1
      %vm358 = vcmp.eq.s32.totalorder %v342, 1
      %vm359 = vcmp.eq.s32.totalorder %v345, 1
      %vm360 = vcmp.eq.s32.totalorder %v348, 1
      %vm361 = vcmp.eq.s32.totalorder %v351, 1
      %vm362 = vcmp.eq.s32.totalorder %v354, 1
      %v363 = vsel %vm355, %v307, %v243
      %v364 = vsel %vm356, %v308, %v244
      %v365 = vsel %vm357, %v309, %v245
      %v366 = vsel %vm358, %v310, %v246
      %v367 = vsel %vm359, %v311, %v247
      %v368 = vsel %vm360, %v312, %v248
      %v369 = vsel %vm361, %v313, %v249
      %v370 = vsel %vm362, %v314, %v250
      %v371 = vsel %vm355, %v315, %v251
      %v372 = vsel %vm356, %v316, %v252
      %v373 = vsel %vm357, %v317, %v253
      %v374 = vsel %vm358, %v318, %v254
      %v375 = vsel %vm359, %v319, %v255
      %v376 = vsel %vm360, %v320, %v256
      %v377 = vsel %vm361, %v321, %v257
      %v378 = vsel %vm362, %v322, %v258
      %379 = vst [vmem:[#allocation4] sm:$0xff] %v363
      %380 = vst [vmem:[#allocation4 + $0x8] sm:$0xff] %v364
      %381 = vst [vmem:[#allocation4 + $0x10] sm:$0xff] %v365
      %382 = vst [vmem:[#allocation4 + $0x18] sm:$0xff] %v366
      %383 = vst [vmem:[#allocation4 + $0x20] sm:$0xff] %v367
      %384 = vst [vmem:[#allocation4 + $0x28] sm:$0xff] %v368
      %385 = vst [vmem:[#allocation4 + $0x30] sm:$0xff] %v369
      %386 = vst [vmem:[#allocation4 + $0x38] sm:$0xff] %v370
      %387 = vst [vmem:[#allocation4 + $0x40] sm:$0xff] %v371
      %388 = vst [vmem:[#allocation4 + $0x48] sm:$0xff] %v372
      %389 = vst [vmem:[#allocation4 + $0x50] sm:$0xff] %v373
      %390 = vst [vmem:[#allocation4 + $0x58] sm:$0xff] %v374
      %391 = vst [vmem:[#allocation4 + $0x60] sm:$0xff] %v375
      %392 = vst [vmem:[#allocation4 + $0x68] sm:$0xff] %v376
      %393 = vst [vmem:[#allocation4 + $0x70] sm:$0xff] %v377
      %394 = vst [vmem:[#allocation4 + $0x78] sm:$0xff] %v378
    $region17: #{tpu_custom_call.1} parent=1 // pred_fallthru
      _
    %s395 = sshra.s32 %s17, 1
    %p396 = scmp.ne.s32.totalorder %s395, 0
    // Predicated region
    $region18: #{tpu_custom_call.1} parent=1 // pred_check
      %p397 = pneg %p396
    $region19: #{tpu_custom_call.1} parent=1 // pred_check_branch
      %399 = sbr.rel (%p397) target = $region21
    $region20: #{tpu_custom_call.1} parent=1 // pred_region
      %v400 = vld [vmem:[#allocation4] sm:$0xff]
      %v401 = vld [vmem:[#allocation4 + $0x8] sm:$0xff]
      %v402 = vld [vmem:[#allocation4 + $0x10] sm:$0xff]
      %v403 = vld [vmem:[#allocation4 + $0x18] sm:$0xff]
      %v404 = vld [vmem:[#allocation4 + $0x20] sm:$0xff]
      %v405 = vld [vmem:[#allocation4 + $0x28] sm:$0xff]
      %v406 = vld [vmem:[#allocation4 + $0x30] sm:$0xff]
      %v407 = vld [vmem:[#allocation4 + $0x38] sm:$0xff]
      %v408 = vld [vmem:[#allocation4 + $0x40] sm:$0xff]
      %v409 = vld [vmem:[#allocation4 + $0x48] sm:$0xff]
      %v410 = vld [vmem:[#allocation4 + $0x50] sm:$0xff]
      %v411 = vld [vmem:[#allocation4 + $0x58] sm:$0xff]
      %v412 = vld [vmem:[#allocation4 + $0x60] sm:$0xff]
      %v413 = vld [vmem:[#allocation4 + $0x68] sm:$0xff]
      %v414 = vld [vmem:[#allocation4 + $0x70] sm:$0xff]
      %v415 = vld [vmem:[#allocation4 + $0x78] sm:$0xff]
      %v416 = vand.u32 %v224, 2
      %v417 = vand.u32 %v226, 2
      %v418 = vand.u32 %v228, 2
      %v419 = vand.u32 %v230, 2
      %v420 = vand.u32 %v232, 2
      %v421 = vand.u32 %v234, 2
      %v422 = vand.u32 %v236, 2
      %v423 = vand.u32 %v238, 2
      %vm424 = vcmp.ne.s32.totalorder %v416, 0
      %vm425 = vcmp.ne.s32.totalorder %v417, 0
      %vm426 = vcmp.ne.s32.totalorder %v418, 0
      %vm427 = vcmp.ne.s32.totalorder %v419, 0
      %vm428 = vcmp.ne.s32.totalorder %v420, 0
      %vm429 = vcmp.ne.s32.totalorder %v421, 0
      %vm430 = vcmp.ne.s32.totalorder %v422, 0
      %vm431 = vcmp.ne.s32.totalorder %v423, 0
      %432 = vrot.lane.b32.xlu0 %v400, 2
      %v433 = vpop.permute.xlu0 %432
      %434 = vrot.lane.b32.xlu0 %v401, 2
      %v435 = vpop.permute.xlu0 %434
      %436 = vrot.lane.b32.xlu0 %v402, 2
      %v437 = vpop.permute.xlu0 %436
      %438 = vrot.lane.b32.xlu0 %v403, 2
      %v439 = vpop.permute.xlu0 %438
      %440 = vrot.lane.b32.xlu0 %v404, 2
      %v441 = vpop.permute.xlu0 %440
      %442 = vrot.lane.b32.xlu0 %v405, 2
      %v443 = vpop.permute.xlu0 %442
      %444 = vrot.lane.b32.xlu0 %v406, 2
      %v445 = vpop.permute.xlu0 %444
      %446 = vrot.lane.b32.xlu0 %v407, 2
      %v447 = vpop.permute.xlu0 %446
      %448 = vrot.lane.b32.xlu0 %v408, 2
      %v449 = vpop.permute.xlu0 %448
      %450 = vrot.lane.b32.xlu0 %v409, 2
      %v451 = vpop.permute.xlu0 %450
      %452 = vrot.lane.b32.xlu0 %v410, 2
      %v453 = vpop.permute.xlu0 %452
      %454 = vrot.lane.b32.xlu0 %v411, 2
      %v455 = vpop.permute.xlu0 %454
      %456 = vrot.lane.b32.xlu0 %v412, 2
      %v457 = vpop.permute.xlu0 %456
      %458 = vrot.lane.b32.xlu0 %v413, 2
      %v459 = vpop.permute.xlu0 %458
      %460 = vrot.lane.b32.xlu0 %v414, 2
      %v461 = vpop.permute.xlu0 %460
      %462 = vrot.lane.b32.xlu0 %v415, 2
      %v463 = vpop.permute.xlu0 %462
      %vm464 = vcmp.ge.s32.totalorder %v43, 2
      %v465 = vsel %vm464, 1, 0
      %vm466 = vcmp.eq.s32.totalorder %v465, 1
      %v467 = vsel %vm466, %v433, 0.0
      %v468 = vsel %vm466, %v435, 0.0
      %v469 = vsel %vm466, %v437, 0.0
      %v470 = vsel %vm466, %v439, 0.0
      %v471 = vsel %vm466, %v441, 0.0
      %v472 = vsel %vm466, %v443, 0.0
      %v473 = vsel %vm466, %v445, 0.0
      %v474 = vsel %vm466, %v447, 0.0
      %v475 = vsel %vm466, %v449, 0.0
      %v476 = vsel %vm466, %v451, 0.0
      %v477 = vsel %vm466, %v453, 0.0
      %v478 = vsel %vm466, %v455, 0.0
      %v479 = vsel %vm466, %v457, 0.0
      %v480 = vsel %vm466, %v459, 0.0
      %v481 = vsel %vm466, %v461, 0.0
      %v482 = vsel %vm466, %v463, 0.0
      %v483 = vsel %vm424, 1, 0
      %v484 = vsel %vm425, 1, 0
      %v485 = vsel %vm426, 1, 0
      %v486 = vsel %vm427, 1, 0
      %v487 = vsel %vm428, 1, 0
      %v488 = vsel %vm429, 1, 0
      %v489 = vsel %vm430, 1, 0
      %v490 = vsel %vm431, 1, 0
      %491 = vset.pattern.permute.xlu0 0
      %492 = vperm.xlu0 %491, %v483
      %v493 = vpop.permute.xlu0 %492
      %494 = vset.pattern.permute.xlu0 0
      %495 = vperm.xlu0 %494, %v484
      %v496 = vpop.permute.xlu0 %495
      %497 = vset.pattern.permute.xlu0 0
      %498 = vperm.xlu0 %497, %v485
      %v499 = vpop.permute.xlu0 %498
      %500 = vset.pattern.permute.xlu0 0
      %501 = vperm.xlu0 %500, %v486
      %v502 = vpop.permute.xlu0 %501
      %503 = vset.pattern.permute.xlu0 0
      %504 = vperm.xlu0 %503, %v487
      %v505 = vpop.permute.xlu0 %504
      %506 = vset.pattern.permute.xlu0 0
      %507 = vperm.xlu0 %506, %v488
      %v508 = vpop.permute.xlu0 %507
      %509 = vset.pattern.permute.xlu0 0
      %510 = vperm.xlu0 %509, %v489
      %v511 = vpop.permute.xlu0 %510
      %512 = vset.pattern.permute.xlu0 0
      %513 = vperm.xlu0 %512, %v490
      %v514 = vpop.permute.xlu0 %513
      %vm515 = vcmp.eq.s32.totalorder %v493, 1
      %vm516 = vcmp.eq.s32.totalorder %v496, 1
      %vm517 = vcmp.eq.s32.totalorder %v499, 1
      %vm518 = vcmp.eq.s32.totalorder %v502, 1
      %vm519 = vcmp.eq.s32.totalorder %v505, 1
      %vm520 = vcmp.eq.s32.totalorder %v508, 1
      %vm521 = vcmp.eq.s32.totalorder %v511, 1
      %vm522 = vcmp.eq.s32.totalorder %v514, 1
      %v523 = vsel %vm515, %v467, %v400
      %v524 = vsel %vm516, %v468, %v401
      %v525 = vsel %vm517, %v469, %v402
      %v526 = vsel %vm518, %v470, %v403
      %v527 = vsel %vm519, %v471, %v404
      %v528 = vsel %vm520, %v472, %v405
      %v529 = vsel %vm521, %v473, %v406
      %v530 = vsel %vm522, %v474, %v407
      %v531 = vsel %vm515, %v475, %v408
      %v532 = vsel %vm516, %v476, %v409
      %v533 = vsel %vm517, %v477, %v410
      %v534 = vsel %vm518, %v478, %v411
      %v535 = vsel %vm519, %v479, %v412
      %v536 = vsel %vm520, %v480, %v413
      %v537 = vsel %vm521, %v481, %v414
      %v538 = vsel %vm522, %v482, %v415
      %539 = vst [vmem:[#allocation4] sm:$0xff] %v523
      %540 = vst [vmem:[#allocation4 + $0x8] sm:$0xff] %v524
      %541 = vst [vmem:[#allocation4 + $0x10] sm:$0xff] %v525
      %542 = vst [vmem:[#allocation4 + $0x18] sm:$0xff] %v526
      %543 = vst [vmem:[#allocation4 + $0x20] sm:$0xff] %v527
      %544 = vst [vmem:[#allocation4 + $0x28] sm:$0xff] %v528
      %545 = vst [vmem:[#allocation4 + $0x30] sm:$0xff] %v529
      %546 = vst [vmem:[#allocation4 + $0x38] sm:$0xff] %v530
      %547 = vst [vmem:[#allocation4 + $0x40] sm:$0xff] %v531
      %548 = vst [vmem:[#allocation4 + $0x48] sm:$0xff] %v532
      %549 = vst [vmem:[#allocation4 + $0x50] sm:$0xff] %v533
      %550 = vst [vmem:[#allocation4 + $0x58] sm:$0xff] %v534
      %551 = vst [vmem:[#allocation4 + $0x60] sm:$0xff] %v535
      %552 = vst [vmem:[#allocation4 + $0x68] sm:$0xff] %v536
      %553 = vst [vmem:[#allocation4 + $0x70] sm:$0xff] %v537
      %554 = vst [vmem:[#allocation4 + $0x78] sm:$0xff] %v538
    $region21: #{tpu_custom_call.1} parent=1 // pred_fallthru
      _
    %s555 = sshra.s32 %s17, 2
    %p556 = scmp.ne.s32.totalorder %s555, 0
    // Predicated region
    $region22: #{tpu_custom_call.1} parent=1 // pred_check
      %p557 = pneg %p556
    $region23: #{tpu_custom_call.1} parent=1 // pred_check_branch
      %559 = sbr.rel (%p557) target = $region25
    $region24: #{tpu_custom_call.1} parent=1 // pred_region
      %v560 = vld [vmem:[#allocation4] sm:$0xff]
      %v561 = vld [vmem:[#allocation4 + $0x8] sm:$0xff]
      %v562 = vld [vmem:[#allocation4 + $0x10] sm:$0xff]
      %v563 = vld [vmem:[#allocation4 + $0x18] sm:$0xff]
      %v564 = vld [vmem:[#allocation4 + $0x20] sm:$0xff]
      %v565 = vld [vmem:[#allocation4 + $0x28] sm:$0xff]
      %v566 = vld [vmem:[#allocation4 + $0x30] sm:$0xff]
      %v567 = vld [vmem:[#allocation4 + $0x38] sm:$0xff]
      %v568 = vld [vmem:[#allocation4 + $0x40] sm:$0xff]
      %v569 = vld [vmem:[#allocation4 + $0x48] sm:$0xff]
      %v570 = vld [vmem:[#allocation4 + $0x50] sm:$0xff]
      %v571 = vld [vmem:[#allocation4 + $0x58] sm:$0xff]
      %v572 = vld [vmem:[#allocation4 + $0x60] sm:$0xff]
      %v573 = vld [vmem:[#allocation4 + $0x68] sm:$0xff]
      %v574 = vld [vmem:[#allocation4 + $0x70] sm:$0xff]
      %v575 = vld [vmem:[#allocation4 + $0x78] sm:$0xff]
      %v576 = vand.u32 %v224, 4
      %v577 = vand.u32 %v226, 4
      %v578 = vand.u32 %v228, 4
      %v579 = vand.u32 %v230, 4
      %v580 = vand.u32 %v232, 4
      %v581 = vand.u32 %v234, 4
      %v582 = vand.u32 %v236, 4
      %v583 = vand.u32 %v238, 4
      %vm584 = vcmp.ne.s32.totalorder %v576, 0
      %vm585 = vcmp.ne.s32.totalorder %v577, 0
      %vm586 = vcmp.ne.s32.totalorder %v578, 0
      %vm587 = vcmp.ne.s32.totalorder %v579, 0
      %vm588 = vcmp.ne.s32.totalorder %v580, 0
      %vm589 = vcmp.ne.s32.totalorder %v581, 0
      %vm590 = vcmp.ne.s32.totalorder %v582, 0
      %vm591 = vcmp.ne.s32.totalorder %v583, 0
      %592 = vrot.lane.b32.xlu0 %v560, 4
      %v593 = vpop.permute.xlu0 %592
      %594 = vrot.lane.b32.xlu0 %v561, 4
      %v595 = vpop.permute.xlu0 %594
      %596 = vrot.lane.b32.xlu0 %v562, 4
      %v597 = vpop.permute.xlu0 %596
      %598 = vrot.lane.b32.xlu0 %v563, 4
      %v599 = vpop.permute.xlu0 %598
      %600 = vrot.lane.b32.xlu0 %v564, 4
      %v601 = vpop.permute.xlu0 %600
      %602 = vrot.lane.b32.xlu0 %v565, 4
      %v603 = vpop.permute.xlu0 %602
      %604 = vrot.lane.b32.xlu0 %v566, 4
      %v605 = vpop.permute.xlu0 %604
      %606 = vrot.lane.b32.xlu0 %v567, 4
      %v607 = vpop.permute.xlu0 %606
      %608 = vrot.lane.b32.xlu0 %v568, 4
      %v609 = vpop.permute.xlu0 %608
      %610 = vrot.lane.b32.xlu0 %v569, 4
      %v611 = vpop.permute.xlu0 %610
      %612 = vrot.lane.b32.xlu0 %v570, 4
      %v613 = vpop.permute.xlu0 %612
      %614 = vrot.lane.b32.xlu0 %v571, 4
      %v615 = vpop.permute.xlu0 %614
      %616 = vrot.lane.b32.xlu0 %v572, 4
      %v617 = vpop.permute.xlu0 %616
      %618 = vrot.lane.b32.xlu0 %v573, 4
      %v619 = vpop.permute.xlu0 %618
      %620 = vrot.lane.b32.xlu0 %v574, 4
      %v621 = vpop.permute.xlu0 %620
      %622 = vrot.lane.b32.xlu0 %v575, 4
      %v623 = vpop.permute.xlu0 %622
      %vm624 = vcmp.ge.s32.totalorder %v43, 4
      %v625 = vsel %vm624, 1, 0
      %vm626 = vcmp.eq.s32.totalorder %v625, 1
      %v627 = vsel %vm626, %v593, 0.0
      %v628 = vsel %vm626, %v595, 0.0
      %v629 = vsel %vm626, %v597, 0.0
      %v630 = vsel %vm626, %v599, 0.0
      %v631 = vsel %vm626, %v601, 0.0
      %v632 = vsel %vm626, %v603, 0.0
      %v633 = vsel %vm626, %v605, 0.0
      %v634 = vsel %vm626, %v607, 0.0
      %v635 = vsel %vm626, %v609, 0.0
      %v636 = vsel %vm626, %v611, 0.0
      %v637 = vsel %vm626, %v613, 0.0
      %v638 = vsel %vm626, %v615, 0.0
      %v639 = vsel %vm626, %v617, 0.0
      %v640 = vsel %vm626, %v619, 0.0
      %v641 = vsel %vm626, %v621, 0.0
      %v642 = vsel %vm626, %v623, 0.0
      %v643 = vsel %vm584, 1, 0
      %v644 = vsel %vm585, 1, 0
      %v645 = vsel %vm586, 1, 0
      %v646 = vsel %vm587, 1, 0
      %v647 = vsel %vm588, 1, 0
      %v648 = vsel %vm589, 1, 0
      %v649 = vsel %vm590, 1, 0
      %v650 = vsel %vm591, 1, 0
      %651 = vset.pattern.permute.xlu0 0
      %652 = vperm.xlu0 %651, %v643
      %v653 = vpop.permute.xlu0 %652
      %654 = vset.pattern.permute.xlu0 0
      %655 = vperm.xlu0 %654, %v644
      %v656 = vpop.permute.xlu0 %655
      %657 = vset.pattern.permute.xlu0 0
      %658 = vperm.xlu0 %657, %v645
      %v659 = vpop.permute.xlu0 %658
      %660 = vset.pattern.permute.xlu0 0
      %661 = vperm.xlu0 %660, %v646
      %v662 = vpop.permute.xlu0 %661
      %663 = vset.pattern.permute.xlu0 0
      %664 = vperm.xlu0 %663, %v647
      %v665 = vpop.permute.xlu0 %664
      %666 = vset.pattern.permute.xlu0 0
      %667 = vperm.xlu0 %666, %v648
      %v668 = vpop.permute.xlu0 %667
      %669 = vset.pattern.permute.xlu0 0
      %670 = vperm.xlu0 %669, %v649
      %v671 = vpop.permute.xlu0 %670
      %672 = vset.pattern.permute.xlu0 0
      %673 = vperm.xlu0 %672, %v650
      %v674 = vpop.permute.xlu0 %673
      %vm675 = vcmp.eq.s32.totalorder %v653, 1
      %vm676 = vcmp.eq.s32.totalorder %v656, 1
      %vm677 = vcmp.eq.s32.totalorder %v659, 1
      %vm678 = vcmp.eq.s32.totalorder %v662, 1
      %vm679 = vcmp.eq.s32.totalorder %v665, 1
      %vm680 = vcmp.eq.s32.totalorder %v668, 1
      %vm681 = vcmp.eq.s32.totalorder %v671, 1
      %vm682 = vcmp.eq.s32.totalorder %v674, 1
      %v683 = vsel %vm675, %v627, %v560
      %v684 = vsel %vm676, %v628, %v561
      %v685 = vsel %vm677, %v629, %v562
      %v686 = vsel %vm678, %v630, %v563
      %v687 = vsel %vm679, %v631, %v564
      %v688 = vsel %vm680, %v632, %v565
      %v689 = vsel %vm681, %v633, %v566
      %v690 = vsel %vm682, %v634, %v567
      %v691 = vsel %vm675, %v635, %v568
      %v692 = vsel %vm676, %v636, %v569
      %v693 = vsel %vm677, %v637, %v570
      %v694 = vsel %vm678, %v638, %v571
      %v695 = vsel %vm679, %v639, %v572
      %v696 = vsel %vm680, %v640, %v573
      %v697 = vsel %vm681, %v641, %v574
      %v698 = vsel %vm682, %v642, %v575
      %699 = vst [vmem:[#allocation4] sm:$0xff] %v683
      %700 = vst [vmem:[#allocation4 + $0x8] sm:$0xff] %v684
      %701 = vst [vmem:[#allocation4 + $0x10] sm:$0xff] %v685
      %702 = vst [vmem:[#allocation4 + $0x18] sm:$0xff] %v686
      %703 = vst [vmem:[#allocation4 + $0x20] sm:$0xff] %v687
      %704 = vst [vmem:[#allocation4 + $0x28] sm:$0xff] %v688
      %705 = vst [vmem:[#allocation4 + $0x30] sm:$0xff] %v689
      %706 = vst [vmem:[#allocation4 + $0x38] sm:$0xff] %v690
      %707 = vst [vmem:[#allocation4 + $0x40] sm:$0xff] %v691
      %708 = vst [vmem:[#allocation4 + $0x48] sm:$0xff] %v692
      %709 = vst [vmem:[#allocation4 + $0x50] sm:$0xff] %v693
      %710 = vst [vmem:[#allocation4 + $0x58] sm:$0xff] %v694
      %711 = vst [vmem:[#allocation4 + $0x60] sm:$0xff] %v695
      %712 = vst [vmem:[#allocation4 + $0x68] sm:$0xff] %v696
      %713 = vst [vmem:[#allocation4 + $0x70] sm:$0xff] %v697
      %714 = vst [vmem:[#allocation4 + $0x78] sm:$0xff] %v698
    $region25: #{tpu_custom_call.1} parent=1 // pred_fallthru
      _
    %s715 = sshra.s32 %s17, 3
    %p716 = scmp.ne.s32.totalorder %s715, 0
    // Predicated region
    $region26: #{tpu_custom_call.1} parent=1 // pred_check
      %p717 = pneg %p716
    $region27: #{tpu_custom_call.1} parent=1 // pred_check_branch
      %719 = sbr.rel (%p717) target = $region29
    $region28: #{tpu_custom_call.1} parent=1 // pred_region
      %v720 = vld [vmem:[#allocation4] sm:$0xff]
      %v721 = vld [vmem:[#allocation4 + $0x8] sm:$0xff]
      %v722 = vld [vmem:[#allocation4 + $0x10] sm:$0xff]
      %v723 = vld [vmem:[#allocation4 + $0x18] sm:$0xff]
      %v724 = vld [vmem:[#allocation4 + $0x20] sm:$0xff]
      %v725 = vld [vmem:[#allocation4 + $0x28] sm:$0xff]
      %v726 = vld [vmem:[#allocation4 + $0x30] sm:$0xff]
      %v727 = vld [vmem:[#allocation4 + $0x38] sm:$0xff]
      %v728 = vld [vmem:[#allocation4 + $0x40] sm:$0xff]
      %v729 = vld [vmem:[#allocation4 + $0x48] sm:$0xff]
      %v730 = vld [vmem:[#allocation4 + $0x50] sm:$0xff]
      %v731 = vld [vmem:[#allocation4 + $0x58] sm:$0xff]
      %v732 = vld [vmem:[#allocation4 + $0x60] sm:$0xff]
      %v733 = vld [vmem:[#allocation4 + $0x68] sm:$0xff]
      %v734 = vld [vmem:[#allocation4 + $0x70] sm:$0xff]
      %v735 = vld [vmem:[#allocation4 + $0x78] sm:$0xff]
      %v736 = vand.u32 %v224, 8
      %v737 = vand.u32 %v226, 8
      %v738 = vand.u32 %v228, 8
      %v739 = vand.u32 %v230, 8
      %v740 = vand.u32 %v232, 8
      %v741 = vand.u32 %v234, 8
      %v742 = vand.u32 %v236, 8
      %v743 = vand.u32 %v238, 8
      %vm744 = vcmp.ne.s32.totalorder %v736, 0
      %vm745 = vcmp.ne.s32.totalorder %v737, 0
      %vm746 = vcmp.ne.s32.totalorder %v738, 0
      %vm747 = vcmp.ne.s32.totalorder %v739, 0
      %vm748 = vcmp.ne.s32.totalorder %v740, 0
      %vm749 = vcmp.ne.s32.totalorder %v741, 0
      %vm750 = vcmp.ne.s32.totalorder %v742, 0
      %vm751 = vcmp.ne.s32.totalorder %v743, 0
      %752 = vrot.lane.b32.xlu0 %v720, 8
      %v753 = vpop.permute.xlu0 %752
      %754 = vrot.lane.b32.xlu0 %v721, 8
      %v755 = vpop.permute.xlu0 %754
      %756 = vrot.lane.b32.xlu0 %v722, 8
      %v757 = vpop.permute.xlu0 %756
      %758 = vrot.lane.b32.xlu0 %v723, 8
      %v759 = vpop.permute.xlu0 %758
      %760 = vrot.lane.b32.xlu0 %v724, 8
      %v761 = vpop.permute.xlu0 %760
      %762 = vrot.lane.b32.xlu0 %v725, 8
      %v763 = vpop.permute.xlu0 %762
      %764 = vrot.lane.b32.xlu0 %v726, 8
      %v765 = vpop.permute.xlu0 %764
      %766 = vrot.lane.b32.xlu0 %v727, 8
      %v767 = vpop.permute.xlu0 %766
      %768 = vrot.lane.b32.xlu0 %v728, 8
      %v769 = vpop.permute.xlu0 %768
      %770 = vrot.lane.b32.xlu0 %v729, 8
      %v771 = vpop.permute.xlu0 %770
      %772 = vrot.lane.b32.xlu0 %v730, 8
      %v773 = vpop.permute.xlu0 %772
      %774 = vrot.lane.b32.xlu0 %v731, 8
      %v775 = vpop.permute.xlu0 %774
      %776 = vrot.lane.b32.xlu0 %v732, 8
      %v777 = vpop.permute.xlu0 %776
      %778 = vrot.lane.b32.xlu0 %v733, 8
      %v779 = vpop.permute.xlu0 %778
      %780 = vrot.lane.b32.xlu0 %v734, 8
      %v781 = vpop.permute.xlu0 %780
      %782 = vrot.lane.b32.xlu0 %v735, 8
      %v783 = vpop.permute.xlu0 %782
      %vm784 = vcmp.ge.s32.totalorder %v43, 8
      %v785 = vsel %vm784, 1, 0
      %vm786 = vcmp.eq.s32.totalorder %v785, 1
      %v787 = vsel %vm786, %v753, 0.0
      %v788 = vsel %vm786, %v755, 0.0
      %v789 = vsel %vm786, %v757, 0.0
      %v790 = vsel %vm786, %v759, 0.0
      %v791 = vsel %vm786, %v761, 0.0
      %v792 = vsel %vm786, %v763, 0.0
      %v793 = vsel %vm786, %v765, 0.0
      %v794 = vsel %vm786, %v767, 0.0
      %v795 = vsel %vm786, %v769, 0.0
      %v796 = vsel %vm786, %v771, 0.0
      %v797 = vsel %vm786, %v773, 0.0
      %v798 = vsel %vm786, %v775, 0.0
      %v799 = vsel %vm786, %v777, 0.0
      %v800 = vsel %vm786, %v779, 0.0
      %v801 = vsel %vm786, %v781, 0.0
      %v802 = vsel %vm786, %v783, 0.0
      %v803 = vsel %vm744, 1, 0
      %v804 = vsel %vm745, 1, 0
      %v805 = vsel %vm746, 1, 0
      %v806 = vsel %vm747, 1, 0
      %v807 = vsel %vm748, 1, 0
      %v808 = vsel %vm749, 1, 0
      %v809 = vsel %vm750, 1, 0
      %v810 = vsel %vm751, 1, 0
      %811 = vset.pattern.permute.xlu0 0
      %812 = vperm.xlu0 %811, %v803
      %v813 = vpop.permute.xlu0 %812
      %814 = vset.pattern.permute.xlu0 0
      %815 = vperm.xlu0 %814, %v804
      %v816 = vpop.permute.xlu0 %815
      %817 = vset.pattern.permute.xlu0 0
      %818 = vperm.xlu0 %817, %v805
      %v819 = vpop.permute.xlu0 %818
      %820 = vset.pattern.permute.xlu0 0
      %821 = vperm.xlu0 %820, %v806
      %v822 = vpop.permute.xlu0 %821
      %823 = vset.pattern.permute.xlu0 0
      %824 = vperm.xlu0 %823, %v807
      %v825 = vpop.permute.xlu0 %824
      %826 = vset.pattern.permute.xlu0 0
      %827 = vperm.xlu0 %826, %v808
      %v828 = vpop.permute.xlu0 %827
      %829 = vset.pattern.permute.xlu0 0
      %830 = vperm.xlu0 %829, %v809
      %v831 = vpop.permute.xlu0 %830
      %832 = vset.pattern.permute.xlu0 0
      %833 = vperm.xlu0 %832, %v810
      %v834 = vpop.permute.xlu0 %833
      %vm835 = vcmp.eq.s32.totalorder %v813, 1
      %vm836 = vcmp.eq.s32.totalorder %v816, 1
      %vm837 = vcmp.eq.s32.totalorder %v819, 1
      %vm838 = vcmp.eq.s32.totalorder %v822, 1
      %vm839 = vcmp.eq.s32.totalorder %v825, 1
      %vm840 = vcmp.eq.s32.totalorder %v828, 1
      %vm841 = vcmp.eq.s32.totalorder %v831, 1
      %vm842 = vcmp.eq.s32.totalorder %v834, 1
      %v843 = vsel %vm835, %v787, %v720
      %v844 = vsel %vm836, %v788, %v721
      %v845 = vsel %vm837, %v789, %v722
      %v846 = vsel %vm838, %v790, %v723
      %v847 = vsel %vm839, %v791, %v724
      %v848 = vsel %vm840, %v792, %v725
      %v849 = vsel %vm841, %v793, %v726
      %v850 = vsel %vm842, %v794, %v727
      %v851 = vsel %vm835, %v795, %v728
      %v852 = vsel %vm836, %v796, %v729
      %v853 = vsel %vm837, %v797, %v730
      %v854 = vsel %vm838, %v798, %v731
      %v855 = vsel %vm839, %v799, %v732
      %v856 = vsel %vm840, %v800, %v733
      %v857 = vsel %vm841, %v801, %v734
      %v858 = vsel %vm842, %v802, %v735
      %859 = vst [vmem:[#allocation4] sm:$0xff] %v843
      %860 = vst [vmem:[#allocation4 + $0x8] sm:$0xff] %v844
      %861 = vst [vmem:[#allocation4 + $0x10] sm:$0xff] %v845
      %862 = vst [vmem:[#allocation4 + $0x18] sm:$0xff] %v846
      %863 = vst [vmem:[#allocation4 + $0x20] sm:$0xff] %v847
      %864 = vst [vmem:[#allocation4 + $0x28] sm:$0xff] %v848
      %865 = vst [vmem:[#allocation4 + $0x30] sm:$0xff] %v849
      %866 = vst [vmem:[#allocation4 + $0x38] sm:$0xff] %v850
      %867 = vst [vmem:[#allocation4 + $0x40] sm:$0xff] %v851
      %868 = vst [vmem:[#allocation4 + $0x48] sm:$0xff] %v852
      %869 = vst [vmem:[#allocation4 + $0x50] sm:$0xff] %v853
      %870 = vst [vmem:[#allocation4 + $0x58] sm:$0xff] %v854
      %871 = vst [vmem:[#allocation4 + $0x60] sm:$0xff] %v855
      %872 = vst [vmem:[#allocation4 + $0x68] sm:$0xff] %v856
      %873 = vst [vmem:[#allocation4 + $0x70] sm:$0xff] %v857
      %874 = vst [vmem:[#allocation4 + $0x78] sm:$0xff] %v858
    $region29: #{tpu_custom_call.1} parent=1 // pred_fallthru
      _
    %s875 = sshra.s32 %s17, 4
    %p876 = scmp.ne.s32.totalorder %s875, 0
    // Predicated region
    $region30: #{tpu_custom_call.1} parent=1 // pred_check
      %p877 = pneg %p876
    $region31: #{tpu_custom_call.1} parent=1 // pred_check_branch
      %879 = sbr.rel (%p877) target = $region33
    $region32: #{tpu_custom_call.1} parent=1 // pred_region
      %v880 = vld [vmem:[#allocation4] sm:$0xff]
      %v881 = vld [vmem:[#allocation4 + $0x8] sm:$0xff]
      %v882 = vld [vmem:[#allocation4 + $0x10] sm:$0xff]
      %v883 = vld [vmem:[#allocation4 + $0x18] sm:$0xff]
      %v884 = vld [vmem:[#allocation4 + $0x20] sm:$0xff]
      %v885 = vld [vmem:[#allocation4 + $0x28] sm:$0xff]
      %v886 = vld [vmem:[#allocation4 + $0x30] sm:$0xff]
      %v887 = vld [vmem:[#allocation4 + $0x38] sm:$0xff]
      %v888 = vld [vmem:[#allocation4 + $0x40] sm:$0xff]
      %v889 = vld [vmem:[#allocation4 + $0x48] sm:$0xff]
      %v890 = vld [vmem:[#allocation4 + $0x50] sm:$0xff]
      %v891 = vld [vmem:[#allocation4 + $0x58] sm:$0xff]
      %v892 = vld [vmem:[#allocation4 + $0x60] sm:$0xff]
      %v893 = vld [vmem:[#allocation4 + $0x68] sm:$0xff]
      %v894 = vld [vmem:[#allocation4 + $0x70] sm:$0xff]
      %v895 = vld [vmem:[#allocation4 + $0x78] sm:$0xff]
      %v896 = vand.u32 %v224, 16
      %v897 = vand.u32 %v226, 16
      %v898 = vand.u32 %v228, 16
      %v899 = vand.u32 %v230, 16
      %v900 = vand.u32 %v232, 16
      %v901 = vand.u32 %v234, 16
      %v902 = vand.u32 %v236, 16
      %v903 = vand.u32 %v238, 16
      %vm904 = vcmp.ne.s32.totalorder %v896, 0
      %vm905 = vcmp.ne.s32.totalorder %v897, 0
      %vm906 = vcmp.ne.s32.totalorder %v898, 0
      %vm907 = vcmp.ne.s32.totalorder %v899, 0
      %vm908 = vcmp.ne.s32.totalorder %v900, 0
      %vm909 = vcmp.ne.s32.totalorder %v901, 0
      %vm910 = vcmp.ne.s32.totalorder %v902, 0
      %vm911 = vcmp.ne.s32.totalorder %v903, 0
      %912 = vrot.lane.b32.xlu0 %v880, 16
      %v913 = vpop.permute.xlu0 %912
      %914 = vrot.lane.b32.xlu0 %v881, 16
      %v915 = vpop.permute.xlu0 %914
      %916 = vrot.lane.b32.xlu0 %v882, 16
      %v917 = vpop.permute.xlu0 %916
      %918 = vrot.lane.b32.xlu0 %v883, 16
      %v919 = vpop.permute.xlu0 %918
      %920 = vrot.lane.b32.xlu0 %v884, 16
      %v921 = vpop.permute.xlu0 %920
      %922 = vrot.lane.b32.xlu0 %v885, 16
      %v923 = vpop.permute.xlu0 %922
      %924 = vrot.lane.b32.xlu0 %v886, 16
      %v925 = vpop.permute.xlu0 %924
      %926 = vrot.lane.b32.xlu0 %v887, 16
      %v927 = vpop.permute.xlu0 %926
      %928 = vrot.lane.b32.xlu0 %v888, 16
      %v929 = vpop.permute.xlu0 %928
      %930 = vrot.lane.b32.xlu0 %v889, 16
      %v931 = vpop.permute.xlu0 %930
      %932 = vrot.lane.b32.xlu0 %v890, 16
      %v933 = vpop.permute.xlu0 %932
      %934 = vrot.lane.b32.xlu0 %v891, 16
      %v935 = vpop.permute.xlu0 %934
      %936 = vrot.lane.b32.xlu0 %v892, 16
      %v937 = vpop.permute.xlu0 %936
      %938 = vrot.lane.b32.xlu0 %v893, 16
      %v939 = vpop.permute.xlu0 %938
      %940 = vrot.lane.b32.xlu0 %v894, 16
      %v941 = vpop.permute.xlu0 %940
      %942 = vrot.lane.b32.xlu0 %v895, 16
      %v943 = vpop.permute.xlu0 %942
      %vm944 = vcmp.ge.s32.totalorder %v43, 16
      %v945 = vsel %vm944, 1, 0
      %vm946 = vcmp.eq.s32.totalorder %v945, 1
      %v947 = vsel %vm946, %v913, 0.0
      %v948 = vsel %vm946, %v915, 0.0
      %v949 = vsel %vm946, %v917, 0.0
      %v950 = vsel %vm946, %v919, 0.0
      %v951 = vsel %vm946, %v921, 0.0
      %v952 = vsel %vm946, %v923, 0.0
      %v953 = vsel %vm946, %v925, 0.0
      %v954 = vsel %vm946, %v927, 0.0
      %v955 = vsel %vm946, %v929, 0.0
      %v956 = vsel %vm946, %v931, 0.0
      %v957 = vsel %vm946, %v933, 0.0
      %v958 = vsel %vm946, %v935, 0.0
      %v959 = vsel %vm946, %v937, 0.0
      %v960 = vsel %vm946, %v939, 0.0
      %v961 = vsel %vm946, %v941, 0.0
      %v962 = vsel %vm946, %v943, 0.0
      %v963 = vsel %vm904, 1, 0
      %v964 = vsel %vm905, 1, 0
      %v965 = vsel %vm906, 1, 0
      %v966 = vsel %vm907, 1, 0
      %v967 = vsel %vm908, 1, 0
      %v968 = vsel %vm909, 1, 0
      %v969 = vsel %vm910, 1, 0
      %v970 = vsel %vm911, 1, 0
      %971 = vset.pattern.permute.xlu0 0
      %972 = vperm.xlu0 %971, %v963
      %v973 = vpop.permute.xlu0 %972
      %974 = vset.pattern.permute.xlu0 0
      %975 = vperm.xlu0 %974, %v964
      %v976 = vpop.permute.xlu0 %975
      %977 = vset.pattern.permute.xlu0 0
      %978 = vperm.xlu0 %977, %v965
      %v979 = vpop.permute.xlu0 %978
      %980 = vset.pattern.permute.xlu0 0
      %981 = vperm.xlu0 %980, %v966
      %v982 = vpop.permute.xlu0 %981
      %983 = vset.pattern.permute.xlu0 0
      %984 = vperm.xlu0 %983, %v967
      %v985 = vpop.permute.xlu0 %984
      %986 = vset.pattern.permute.xlu0 0
      %987 = vperm.xlu0 %986, %v968
      %v988 = vpop.permute.xlu0 %987
      %989 = vset.pattern.permute.xlu0 0
      %990 = vperm.xlu0 %989, %v969
      %v991 = vpop.permute.xlu0 %990
      %992 = vset.pattern.permute.xlu0 0
      %993 = vperm.xlu0 %992, %v970
      %v994 = vpop.permute.xlu0 %993
      %vm995 = vcmp.eq.s32.totalorder %v973, 1
      %vm996 = vcmp.eq.s32.totalorder %v976, 1
      %vm997 = vcmp.eq.s32.totalorder %v979, 1
      %vm998 = vcmp.eq.s32.totalorder %v982, 1
      %vm999 = vcmp.eq.s32.totalorder %v985, 1
      %vm1000 = vcmp.eq.s32.totalorder %v988, 1
      %vm1001 = vcmp.eq.s32.totalorder %v991, 1
      %vm1002 = vcmp.eq.s32.totalorder %v994, 1
      %v1003 = vsel %vm995, %v947, %v880
      %v1004 = vsel %vm996, %v948, %v881
      %v1005 = vsel %vm997, %v949, %v882
      %v1006 = vsel %vm998, %v950, %v883
      %v1007 = vsel %vm999, %v951, %v884
      %v1008 = vsel %vm1000, %v952, %v885
      %v1009 = vsel %vm1001, %v953, %v886
      %v1010 = vsel %vm1002, %v954, %v887
      %v1011 = vsel %vm995, %v955, %v888
      %v1012 = vsel %vm996, %v956, %v889
      %v1013 = vsel %vm997, %v957, %v890
      %v1014 = vsel %vm998, %v958, %v891
      %v1015 = vsel %vm999, %v959, %v892
      %v1016 = vsel %vm1000, %v960, %v893
      %v1017 = vsel %vm1001, %v961, %v894
      %v1018 = vsel %vm1002, %v962, %v895
      %1019 = vst [vmem:[#allocation4] sm:$0xff] %v1003
      %1020 = vst [vmem:[#allocation4 + $0x8] sm:$0xff] %v1004
      %1021 = vst [vmem:[#allocation4 + $0x10] sm:$0xff] %v1005
      %1022 = vst [vmem:[#allocation4 + $0x18] sm:$0xff] %v1006
      %1023 = vst [vmem:[#allocation4 + $0x20] sm:$0xff] %v1007
      %1024 = vst [vmem:[#allocation4 + $0x28] sm:$0xff] %v1008
      %1025 = vst [vmem:[#allocation4 + $0x30] sm:$0xff] %v1009
      %1026 = vst [vmem:[#allocation4 + $0x38] sm:$0xff] %v1010
      %1027 = vst [vmem:[#allocation4 + $0x40] sm:$0xff] %v1011
      %1028 = vst [vmem:[#allocation4 + $0x48] sm:$0xff] %v1012
      %1029 = vst [vmem:[#allocation4 + $0x50] sm:$0xff] %v1013
      %1030 = vst [vmem:[#allocation4 + $0x58] sm:$0xff] %v1014
      %1031 = vst [vmem:[#allocation4 + $0x60] sm:$0xff] %v1015
      %1032 = vst [vmem:[#allocation4 + $0x68] sm:$0xff] %v1016
      %1033 = vst [vmem:[#allocation4 + $0x70] sm:$0xff] %v1017
      %1034 = vst [vmem:[#allocation4 + $0x78] sm:$0xff] %v1018
    $region33: #{tpu_custom_call.1} parent=1 // pred_fallthru
      _
    %s1035 = sshra.s32 %s17, 5
    %p1036 = scmp.ne.s32.totalorder %s1035, 0
    // Predicated region
    $region34: #{tpu_custom_call.1} parent=1 // pred_check
      %p1037 = pneg %p1036
    $region35: #{tpu_custom_call.1} parent=1 // pred_check_branch
      %1039 = sbr.rel (%p1037) target = $region37
    $region36: #{tpu_custom_call.1} parent=1 // pred_region
      %v1040 = vld [vmem:[#allocation4] sm:$0xff]
      %v1041 = vld [vmem:[#allocation4 + $0x8] sm:$0xff]
      %v1042 = vld [vmem:[#allocation4 + $0x10] sm:$0xff]
      %v1043 = vld [vmem:[#allocation4 + $0x18] sm:$0xff]
      %v1044 = vld [vmem:[#allocation4 + $0x20] sm:$0xff]
      %v1045 = vld [vmem:[#allocation4 + $0x28] sm:$0xff]
      %v1046 = vld [vmem:[#allocation4 + $0x30] sm:$0xff]
      %v1047 = vld [vmem:[#allocation4 + $0x38] sm:$0xff]
      %v1048 = vld [vmem:[#allocation4 + $0x40] sm:$0xff]
      %v1049 = vld [vmem:[#allocation4 + $0x48] sm:$0xff]
      %v1050 = vld [vmem:[#allocation4 + $0x50] sm:$0xff]
      %v1051 = vld [vmem:[#allocation4 + $0x58] sm:$0xff]
      %v1052 = vld [vmem:[#allocation4 + $0x60] sm:$0xff]
      %v1053 = vld [vmem:[#allocation4 + $0x68] sm:$0xff]
      %v1054 = vld [vmem:[#allocation4 + $0x70] sm:$0xff]
      %v1055 = vld [vmem:[#allocation4 + $0x78] sm:$0xff]
      %v1056 = vand.u32 %v224, 32
      %v1057 = vand.u32 %v226, 32
      %v1058 = vand.u32 %v228, 32
      %v1059 = vand.u32 %v230, 32
      %v1060 = vand.u32 %v232, 32
      %v1061 = vand.u32 %v234, 32
      %v1062 = vand.u32 %v236, 32
      %v1063 = vand.u32 %v238, 32
      %vm1064 = vcmp.ne.s32.totalorder %v1056, 0
      %vm1065 = vcmp.ne.s32.totalorder %v1057, 0
      %vm1066 = vcmp.ne.s32.totalorder %v1058, 0
      %vm1067 = vcmp.ne.s32.totalorder %v1059, 0
      %vm1068 = vcmp.ne.s32.totalorder %v1060, 0
      %vm1069 = vcmp.ne.s32.totalorder %v1061, 0
      %vm1070 = vcmp.ne.s32.totalorder %v1062, 0
      %vm1071 = vcmp.ne.s32.totalorder %v1063, 0
      %1072 = vrot.lane.b32.xlu0 %v1040, 32
      %v1073 = vpop.permute.xlu0 %1072
      %1074 = vrot.lane.b32.xlu0 %v1041, 32
      %v1075 = vpop.permute.xlu0 %1074
      %1076 = vrot.lane.b32.xlu0 %v1042, 32
      %v1077 = vpop.permute.xlu0 %1076
      %1078 = vrot.lane.b32.xlu0 %v1043, 32
      %v1079 = vpop.permute.xlu0 %1078
      %1080 = vrot.lane.b32.xlu0 %v1044, 32
      %v1081 = vpop.permute.xlu0 %1080
      %1082 = vrot.lane.b32.xlu0 %v1045, 32
      %v1083 = vpop.permute.xlu0 %1082
      %1084 = vrot.lane.b32.xlu0 %v1046, 32
      %v1085 = vpop.permute.xlu0 %1084
      %1086 = vrot.lane.b32.xlu0 %v1047, 32
      %v1087 = vpop.permute.xlu0 %1086
      %1088 = vrot.lane.b32.xlu0 %v1048, 32
      %v1089 = vpop.permute.xlu0 %1088
      %1090 = vrot.lane.b32.xlu0 %v1049, 32
      %v1091 = vpop.permute.xlu0 %1090
      %1092 = vrot.lane.b32.xlu0 %v1050, 32
      %v1093 = vpop.permute.xlu0 %1092
      %1094 = vrot.lane.b32.xlu0 %v1051, 32
      %v1095 = vpop.permute.xlu0 %1094
      %1096 = vrot.lane.b32.xlu0 %v1052, 32
      %v1097 = vpop.permute.xlu0 %1096
      %1098 = vrot.lane.b32.xlu0 %v1053, 32
      %v1099 = vpop.permute.xlu0 %1098
      %1100 = vrot.lane.b32.xlu0 %v1054, 32
      %v1101 = vpop.permute.xlu0 %1100
      %1102 = vrot.lane.b32.xlu0 %v1055, 32
      %v1103 = vpop.permute.xlu0 %1102
      %vm1104 = vcmp.ge.s32.totalorder %v43, 32
      %v1105 = vsel %vm1104, 1, 0
      %vm1106 = vcmp.eq.s32.totalorder %v1105, 1
      %v1107 = vsel %vm1106, %v1073, 0.0
      %v1108 = vsel %vm1106, %v1075, 0.0
      %v1109 = vsel %vm1106, %v1077, 0.0
      %v1110 = vsel %vm1106, %v1079, 0.0
      %v1111 = vsel %vm1106, %v1081, 0.0
      %v1112 = vsel %vm1106, %v1083, 0.0
      %v1113 = vsel %vm1106, %v1085, 0.0
      %v1114 = vsel %vm1106, %v1087, 0.0
      %v1115 = vsel %vm1106, %v1089, 0.0
      %v1116 = vsel %vm1106, %v1091, 0.0
      %v1117 = vsel %vm1106, %v1093, 0.0
      %v1118 = vsel %vm1106, %v1095, 0.0
      %v1119 = vsel %vm1106, %v1097, 0.0
      %v1120 = vsel %vm1106, %v1099, 0.0
      %v1121 = vsel %vm1106, %v1101, 0.0
      %v1122 = vsel %vm1106, %v1103, 0.0
      %v1123 = vsel %vm1064, 1, 0
      %v1124 = vsel %vm1065, 1, 0
      %v1125 = vsel %vm1066, 1, 0
      %v1126 = vsel %vm1067, 1, 0
      %v1127 = vsel %vm1068, 1, 0
      %v1128 = vsel %vm1069, 1, 0
      %v1129 = vsel %vm1070, 1, 0
      %v1130 = vsel %vm1071, 1, 0
      %1131 = vset.pattern.permute.xlu0 0
      %1132 = vperm.xlu0 %1131, %v1123
      %v1133 = vpop.permute.xlu0 %1132
      %1134 = vset.pattern.permute.xlu0 0
      %1135 = vperm.xlu0 %1134, %v1124
      %v1136 = vpop.permute.xlu0 %1135
      %1137 = vset.pattern.permute.xlu0 0
      %1138 = vperm.xlu0 %1137, %v1125
      %v1139 = vpop.permute.xlu0 %1138
      %1140 = vset.pattern.permute.xlu0 0
      %1141 = vperm.xlu0 %1140, %v1126
      %v1142 = vpop.permute.xlu0 %1141
      %1143 = vset.pattern.permute.xlu0 0
      %1144 = vperm.xlu0 %1143, %v1127
      %v1145 = vpop.permute.xlu0 %1144
      %1146 = vset.pattern.permute.xlu0 0
      %1147 = vperm.xlu0 %1146, %v1128
      %v1148 = vpop.permute.xlu0 %1147
      %1149 = vset.pattern.permute.xlu0 0
      %1150 = vperm.xlu0 %1149, %v1129
      %v1151 = vpop.permute.xlu0 %1150
      %1152 = vset.pattern.permute.xlu0 0
      %1153 = vperm.xlu0 %1152, %v1130
      %v1154 = vpop.permute.xlu0 %1153
      %vm1155 = vcmp.eq.s32.totalorder %v1133, 1
      %vm1156 = vcmp.eq.s32.totalorder %v1136, 1
      %vm1157 = vcmp.eq.s32.totalorder %v1139, 1
      %vm1158 = vcmp.eq.s32.totalorder %v1142, 1
      %vm1159 = vcmp.eq.s32.totalorder %v1145, 1
      %vm1160 = vcmp.eq.s32.totalorder %v1148, 1
      %vm1161 = vcmp.eq.s32.totalorder %v1151, 1
      %vm1162 = vcmp.eq.s32.totalorder %v1154, 1
      %v1163 = vsel %vm1155, %v1107, %v1040
      %v1164 = vsel %vm1156, %v1108, %v1041
      %v1165 = vsel %vm1157, %v1109, %v1042
      %v1166 = vsel %vm1158, %v1110, %v1043
      %v1167 = vsel %vm1159, %v1111, %v1044
      %v1168 = vsel %vm1160, %v1112, %v1045
      %v1169 = vsel %vm1161, %v1113, %v1046
      %v1170 = vsel %vm1162, %v1114, %v1047
      %v1171 = vsel %vm1155, %v1115, %v1048
      %v1172 = vsel %vm1156, %v1116, %v1049
      %v1173 = vsel %vm1157, %v1117, %v1050
      %v1174 = vsel %vm1158, %v1118, %v1051
      %v1175 = vsel %vm1159, %v1119, %v1052
      %v1176 = vsel %vm1160, %v1120, %v1053
      %v1177 = vsel %vm1161, %v1121, %v1054
      %v1178 = vsel %vm1162, %v1122, %v1055
      %1179 = vst [vmem:[#allocation4] sm:$0xff] %v1163
      %1180 = vst [vmem:[#allocation4 + $0x8] sm:$0xff] %v1164
      %1181 = vst [vmem:[#allocation4 + $0x10] sm:$0xff] %v1165
      %1182 = vst [vmem:[#allocation4 + $0x18] sm:$0xff] %v1166
      %1183 = vst [vmem:[#allocation4 + $0x20] sm:$0xff] %v1167
      %1184 = vst [vmem:[#allocation4 + $0x28] sm:$0xff] %v1168
      %1185 = vst [vmem:[#allocation4 + $0x30] sm:$0xff] %v1169
      %1186 = vst [vmem:[#allocation4 + $0x38] sm:$0xff] %v1170
      %1187 = vst [vmem:[#allocation4 + $0x40] sm:$0xff] %v1171
      %1188 = vst [vmem:[#allocation4 + $0x48] sm:$0xff] %v1172
      %1189 = vst [vmem:[#allocation4 + $0x50] sm:$0xff] %v1173
      %1190 = vst [vmem:[#allocation4 + $0x58] sm:$0xff] %v1174
      %1191 = vst [vmem:[#allocation4 + $0x60] sm:$0xff] %v1175
      %1192 = vst [vmem:[#allocation4 + $0x68] sm:$0xff] %v1176
      %1193 = vst [vmem:[#allocation4 + $0x70] sm:$0xff] %v1177
      %1194 = vst [vmem:[#allocation4 + $0x78] sm:$0xff] %v1178
    $region37: #{tpu_custom_call.1} parent=1 // pred_fallthru
      _
    %s1195 = sshra.s32 %s17, 6
    %p1196 = scmp.ne.s32.totalorder %s1195, 0
    // Predicated region
    $region38: #{tpu_custom_call.1} parent=1 // pred_check
      %p1197 = pneg %p1196
    $region39: #{tpu_custom_call.1} parent=1 // pred_check_branch
      %1199 = sbr.rel (%p1197) target = $region41
    $region40: #{tpu_custom_call.1} parent=1 // pred_region
      %v1200 = vld [vmem:[#allocation4] sm:$0xff]
      %v1201 = vld [vmem:[#allocation4 + $0x8] sm:$0xff]
      %v1202 = vld [vmem:[#allocation4 + $0x10] sm:$0xff]
      %v1203 = vld [vmem:[#allocation4 + $0x18] sm:$0xff]
      %v1204 = vld [vmem:[#allocation4 + $0x20] sm:$0xff]
      %v1205 = vld [vmem:[#allocation4 + $0x28] sm:$0xff]
      %v1206 = vld [vmem:[#allocation4 + $0x30] sm:$0xff]
      %v1207 = vld [vmem:[#allocation4 + $0x38] sm:$0xff]
      %v1208 = vld [vmem:[#allocation4 + $0x40] sm:$0xff]
      %v1209 = vld [vmem:[#allocation4 + $0x48] sm:$0xff]
      %v1210 = vld [vmem:[#allocation4 + $0x50] sm:$0xff]
      %v1211 = vld [vmem:[#allocation4 + $0x58] sm:$0xff]
      %v1212 = vld [vmem:[#allocation4 + $0x60] sm:$0xff]
      %v1213 = vld [vmem:[#allocation4 + $0x68] sm:$0xff]
      %v1214 = vld [vmem:[#allocation4 + $0x70] sm:$0xff]
      %v1215 = vld [vmem:[#allocation4 + $0x78] sm:$0xff]
      %v1216 = vand.u32 %v224, 64
      %v1217 = vand.u32 %v226, 64
      %v1218 = vand.u32 %v228, 64
      %v1219 = vand.u32 %v230, 64
      %v1220 = vand.u32 %v232, 64
      %v1221 = vand.u32 %v234, 64
      %v1222 = vand.u32 %v236, 64
      %v1223 = vand.u32 %v238, 64
      %vm1224 = vcmp.ne.s32.totalorder %v1216, 0
      %vm1225 = vcmp.ne.s32.totalorder %v1217, 0
      %vm1226 = vcmp.ne.s32.totalorder %v1218, 0
      %vm1227 = vcmp.ne.s32.totalorder %v1219, 0
      %vm1228 = vcmp.ne.s32.totalorder %v1220, 0
      %vm1229 = vcmp.ne.s32.totalorder %v1221, 0
      %vm1230 = vcmp.ne.s32.totalorder %v1222, 0
      %vm1231 = vcmp.ne.s32.totalorder %v1223, 0
      %1232 = vrot.lane.b32.xlu0 %v1200, 64
      %v1233 = vpop.permute.xlu0 %1232
      %1234 = vrot.lane.b32.xlu0 %v1201, 64
      %v1235 = vpop.permute.xlu0 %1234
      %1236 = vrot.lane.b32.xlu0 %v1202, 64
      %v1237 = vpop.permute.xlu0 %1236
      %1238 = vrot.lane.b32.xlu0 %v1203, 64
      %v1239 = vpop.permute.xlu0 %1238
      %1240 = vrot.lane.b32.xlu0 %v1204, 64
      %v1241 = vpop.permute.xlu0 %1240
      %1242 = vrot.lane.b32.xlu0 %v1205, 64
      %v1243 = vpop.permute.xlu0 %1242
      %1244 = vrot.lane.b32.xlu0 %v1206, 64
      %v1245 = vpop.permute.xlu0 %1244
      %1246 = vrot.lane.b32.xlu0 %v1207, 64
      %v1247 = vpop.permute.xlu0 %1246
      %1248 = vrot.lane.b32.xlu0 %v1208, 64
      %v1249 = vpop.permute.xlu0 %1248
      %1250 = vrot.lane.b32.xlu0 %v1209, 64
      %v1251 = vpop.permute.xlu0 %1250
      %1252 = vrot.lane.b32.xlu0 %v1210, 64
      %v1253 = vpop.permute.xlu0 %1252
      %1254 = vrot.lane.b32.xlu0 %v1211, 64
      %v1255 = vpop.permute.xlu0 %1254
      %1256 = vrot.lane.b32.xlu0 %v1212, 64
      %v1257 = vpop.permute.xlu0 %1256
      %1258 = vrot.lane.b32.xlu0 %v1213, 64
      %v1259 = vpop.permute.xlu0 %1258
      %1260 = vrot.lane.b32.xlu0 %v1214, 64
      %v1261 = vpop.permute.xlu0 %1260
      %1262 = vrot.lane.b32.xlu0 %v1215, 64
      %v1263 = vpop.permute.xlu0 %1262
      %vm1264 = vcmp.ge.s32.totalorder %v43, 64
      %v1265 = vsel %vm1264, 1, 0
      %vm1266 = vcmp.eq.s32.totalorder %v1265, 1
      %v1267 = vsel %vm1266, %v1233, 0.0
      %v1268 = vsel %vm1266, %v1235, 0.0
      %v1269 = vsel %vm1266, %v1237, 0.0
      %v1270 = vsel %vm1266, %v1239, 0.0
      %v1271 = vsel %vm1266, %v1241, 0.0
      %v1272 = vsel %vm1266, %v1243, 0.0
      %v1273 = vsel %vm1266, %v1245, 0.0
      %v1274 = vsel %vm1266, %v1247, 0.0
      %v1275 = vsel %vm1266, %v1249, 0.0
      %v1276 = vsel %vm1266, %v1251, 0.0
      %v1277 = vsel %vm1266, %v1253, 0.0
      %v1278 = vsel %vm1266, %v1255, 0.0
      %v1279 = vsel %vm1266, %v1257, 0.0
      %v1280 = vsel %vm1266, %v1259, 0.0
      %v1281 = vsel %vm1266, %v1261, 0.0
      %v1282 = vsel %vm1266, %v1263, 0.0
      %v1283 = vsel %vm1224, 1, 0
      %v1284 = vsel %vm1225, 1, 0
      %v1285 = vsel %vm1226, 1, 0
      %v1286 = vsel %vm1227, 1, 0
      %v1287 = vsel %vm1228, 1, 0
      %v1288 = vsel %vm1229, 1, 0
      %v1289 = vsel %vm1230, 1, 0
      %v1290 = vsel %vm1231, 1, 0
      %1291 = vset.pattern.permute.xlu0 0
      %1292 = vperm.xlu0 %1291, %v1283
      %v1293 = vpop.permute.xlu0 %1292
      %1294 = vset.pattern.permute.xlu0 0
      %1295 = vperm.xlu0 %1294, %v1284
      %v1296 = vpop.permute.xlu0 %1295
      %1297 = vset.pattern.permute.xlu0 0
      %1298 = vperm.xlu0 %1297, %v1285
      %v1299 = vpop.permute.xlu0 %1298
      %1300 = vset.pattern.permute.xlu0 0
      %1301 = vperm.xlu0 %1300, %v1286
      %v1302 = vpop.permute.xlu0 %1301
      %1303 = vset.pattern.permute.xlu0 0
      %1304 = vperm.xlu0 %1303, %v1287
      %v1305 = vpop.permute.xlu0 %1304
      %1306 = vset.pattern.permute.xlu0 0
      %1307 = vperm.xlu0 %1306, %v1288
      %v1308 = vpop.permute.xlu0 %1307
      %1309 = vset.pattern.permute.xlu0 0
      %1310 = vperm.xlu0 %1309, %v1289
      %v1311 = vpop.permute.xlu0 %1310
      %1312 = vset.pattern.permute.xlu0 0
      %1313 = vperm.xlu0 %1312, %v1290
      %v1314 = vpop.permute.xlu0 %1313
      %vm1315 = vcmp.eq.s32.totalorder %v1293, 1
      %vm1316 = vcmp.eq.s32.totalorder %v1296, 1
      %vm1317 = vcmp.eq.s32.totalorder %v1299, 1
      %vm1318 = vcmp.eq.s32.totalorder %v1302, 1
      %vm1319 = vcmp.eq.s32.totalorder %v1305, 1
      %vm1320 = vcmp.eq.s32.totalorder %v1308, 1
      %vm1321 = vcmp.eq.s32.totalorder %v1311, 1
      %vm1322 = vcmp.eq.s32.totalorder %v1314, 1
      %v1323 = vsel %vm1315, %v1267, %v1200
      %v1324 = vsel %vm1316, %v1268, %v1201
      %v1325 = vsel %vm1317, %v1269, %v1202
      %v1326 = vsel %vm1318, %v1270, %v1203
      %v1327 = vsel %vm1319, %v1271, %v1204
      %v1328 = vsel %vm1320, %v1272, %v1205
      %v1329 = vsel %vm1321, %v1273, %v1206
      %v1330 = vsel %vm1322, %v1274, %v1207
      %v1331 = vsel %vm1315, %v1275, %v1208
      %v1332 = vsel %vm1316, %v1276, %v1209
      %v1333 = vsel %vm1317, %v1277, %v1210
      %v1334 = vsel %vm1318, %v1278, %v1211
      %v1335 = vsel %vm1319, %v1279, %v1212
      %v1336 = vsel %vm1320, %v1280, %v1213
      %v1337 = vsel %vm1321, %v1281, %v1214
      %v1338 = vsel %vm1322, %v1282, %v1215
      %1339 = vst [vmem:[#allocation4] sm:$0xff] %v1323
      %1340 = vst [vmem:[#allocation4 + $0x8] sm:$0xff] %v1324
      %1341 = vst [vmem:[#allocation4 + $0x10] sm:$0xff] %v1325
      %1342 = vst [vmem:[#allocation4 + $0x18] sm:$0xff] %v1326
      %1343 = vst [vmem:[#allocation4 + $0x20] sm:$0xff] %v1327
      %1344 = vst [vmem:[#allocation4 + $0x28] sm:$0xff] %v1328
      %1345 = vst [vmem:[#allocation4 + $0x30] sm:$0xff] %v1329
      %1346 = vst [vmem:[#allocation4 + $0x38] sm:$0xff] %v1330
      %1347 = vst [vmem:[#allocation4 + $0x40] sm:$0xff] %v1331
      %1348 = vst [vmem:[#allocation4 + $0x48] sm:$0xff] %v1332
      %1349 = vst [vmem:[#allocation4 + $0x50] sm:$0xff] %v1333
      %1350 = vst [vmem:[#allocation4 + $0x58] sm:$0xff] %v1334
      %1351 = vst [vmem:[#allocation4 + $0x60] sm:$0xff] %v1335
      %1352 = vst [vmem:[#allocation4 + $0x68] sm:$0xff] %v1336
      %1353 = vst [vmem:[#allocation4 + $0x70] sm:$0xff] %v1337
      %1354 = vst [vmem:[#allocation4 + $0x78] sm:$0xff] %v1338
    $region41: #{tpu_custom_call.1} parent=1 // pred_fallthru
      _
    %s1355 = sshra.s32 %s17, 7
    %p1356 = scmp.ne.s32.totalorder %s1355, 0
    // Predicated region
    $region42: #{tpu_custom_call.1} parent=1 // pred_check
      %p1357 = pneg %p1356
    $region43: #{tpu_custom_call.1} parent=1 // pred_check_branch
      %1359 = sbr.rel (%p1357) target = $region45
    $region44: #{tpu_custom_call.1} parent=1 // pred_region
      %v1360 = vld [vmem:[#allocation4] sm:$0xff]
      %v1361 = vld [vmem:[#allocation4 + $0x8] sm:$0xff]
      %v1362 = vld [vmem:[#allocation4 + $0x10] sm:$0xff]
      %v1363 = vld [vmem:[#allocation4 + $0x18] sm:$0xff]
      %v1364 = vld [vmem:[#allocation4 + $0x20] sm:$0xff]
      %v1365 = vld [vmem:[#allocation4 + $0x28] sm:$0xff]
      %v1366 = vld [vmem:[#allocation4 + $0x30] sm:$0xff]
      %v1367 = vld [vmem:[#allocation4 + $0x38] sm:$0xff]
      %v1368 = vld [vmem:[#allocation4 + $0x40] sm:$0xff]
      %v1369 = vld [vmem:[#allocation4 + $0x48] sm:$0xff]
      %v1370 = vld [vmem:[#allocation4 + $0x50] sm:$0xff]
      %v1371 = vld [vmem:[#allocation4 + $0x58] sm:$0xff]
      %v1372 = vld [vmem:[#allocation4 + $0x60] sm:$0xff]
      %v1373 = vld [vmem:[#allocation4 + $0x68] sm:$0xff]
      %v1374 = vld [vmem:[#allocation4 + $0x70] sm:$0xff]
      %v1375 = vld [vmem:[#allocation4 + $0x78] sm:$0xff]
      %v1376 = vand.u32 %v224, 128
      %v1377 = vand.u32 %v226, 128
      %v1378 = vand.u32 %v228, 128
      %v1379 = vand.u32 %v230, 128
      %v1380 = vand.u32 %v232, 128
      %v1381 = vand.u32 %v234, 128
      %v1382 = vand.u32 %v236, 128
      %v1383 = vand.u32 %v238, 128
      %vm1384 = vcmp.ne.s32.totalorder %v1376, 0
      %vm1385 = vcmp.ne.s32.totalorder %v1377, 0
      %vm1386 = vcmp.ne.s32.totalorder %v1378, 0
      %vm1387 = vcmp.ne.s32.totalorder %v1379, 0
      %vm1388 = vcmp.ne.s32.totalorder %v1380, 0
      %vm1389 = vcmp.ne.s32.totalorder %v1381, 0
      %vm1390 = vcmp.ne.s32.totalorder %v1382, 0
      %vm1391 = vcmp.ne.s32.totalorder %v1383, 0
      %v1392 = vsel %vm1384, 1, 0
      %v1393 = vsel %vm1385, 1, 0
      %v1394 = vsel %vm1386, 1, 0
      %v1395 = vsel %vm1387, 1, 0
      %v1396 = vsel %vm1388, 1, 0
      %v1397 = vsel %vm1389, 1, 0
      %v1398 = vsel %vm1390, 1, 0
      %v1399 = vsel %vm1391, 1, 0
      %1400 = vset.pattern.permute.xlu0 0
      %1401 = vperm.xlu0 %1400, %v1392
      %v1402 = vpop.permute.xlu0 %1401
      %1403 = vset.pattern.permute.xlu0 0
      %1404 = vperm.xlu0 %1403, %v1393
      %v1405 = vpop.permute.xlu0 %1404
      %1406 = vset.pattern.permute.xlu0 0
      %1407 = vperm.xlu0 %1406, %v1394
      %v1408 = vpop.permute.xlu0 %1407
      %1409 = vset.pattern.permute.xlu0 0
      %1410 = vperm.xlu0 %1409, %v1395
      %v1411 = vpop.permute.xlu0 %1410
      %1412 = vset.pattern.permute.xlu0 0
      %1413 = vperm.xlu0 %1412, %v1396
      %v1414 = vpop.permute.xlu0 %1413
      %1415 = vset.pattern.permute.xlu0 0
      %1416 = vperm.xlu0 %1415, %v1397
      %v1417 = vpop.permute.xlu0 %1416
      %1418 = vset.pattern.permute.xlu0 0
      %1419 = vperm.xlu0 %1418, %v1398
      %v1420 = vpop.permute.xlu0 %1419
      %1421 = vset.pattern.permute.xlu0 0
      %1422 = vperm.xlu0 %1421, %v1399
      %v1423 = vpop.permute.xlu0 %1422
      %vm1424 = vcmp.eq.s32.totalorder %v1402, 1
      %vm1425 = vcmp.eq.s32.totalorder %v1405, 1
      %vm1426 = vcmp.eq.s32.totalorder %v1408, 1
      %vm1427 = vcmp.eq.s32.totalorder %v1411, 1
      %vm1428 = vcmp.eq.s32.totalorder %v1414, 1
      %vm1429 = vcmp.eq.s32.totalorder %v1417, 1
      %vm1430 = vcmp.eq.s32.totalorder %v1420, 1
      %vm1431 = vcmp.eq.s32.totalorder %v1423, 1
      %v1432 = vsel %vm1424, 0.0, %v1360
      %v1433 = vsel %vm1425, 0.0, %v1361
      %v1434 = vsel %vm1426, 0.0, %v1362
      %v1435 = vsel %vm1427, 0.0, %v1363
      %v1436 = vsel %vm1428, 0.0, %v1364
      %v1437 = vsel %vm1429, 0.0, %v1365
      %v1438 = vsel %vm1430, 0.0, %v1366
      %v1439 = vsel %vm1431, 0.0, %v1367
      %v1440 = vsel %vm1424, 0.0, %v1368
      %v1441 = vsel %vm1425, 0.0, %v1369
      %v1442 = vsel %vm1426, 0.0, %v1370
      %v1443 = vsel %vm1427, 0.0, %v1371
      %v1444 = vsel %vm1428, 0.0, %v1372
      %v1445 = vsel %vm1429, 0.0, %v1373
      %v1446 = vsel %vm1430, 0.0, %v1374
      %v1447 = vsel %vm1431, 0.0, %v1375
      %1448 = vst [vmem:[#allocation4] sm:$0xff] %v1432
      %1449 = vst [vmem:[#allocation4 + $0x8] sm:$0xff] %v1433
      %1450 = vst [vmem:[#allocation4 + $0x10] sm:$0xff] %v1434
      %1451 = vst [vmem:[#allocation4 + $0x18] sm:$0xff] %v1435
      %1452 = vst [vmem:[#allocation4 + $0x20] sm:$0xff] %v1436
      %1453 = vst [vmem:[#allocation4 + $0x28] sm:$0xff] %v1437
      %1454 = vst [vmem:[#allocation4 + $0x30] sm:$0xff] %v1438
      %1455 = vst [vmem:[#allocation4 + $0x38] sm:$0xff] %v1439
      %1456 = vst [vmem:[#allocation4 + $0x40] sm:$0xff] %v1440
      %1457 = vst [vmem:[#allocation4 + $0x48] sm:$0xff] %v1441
      %1458 = vst [vmem:[#allocation4 + $0x50] sm:$0xff] %v1442
      %1459 = vst [vmem:[#allocation4 + $0x58] sm:$0xff] %v1443
      %1460 = vst [vmem:[#allocation4 + $0x60] sm:$0xff] %v1444
      %1461 = vst [vmem:[#allocation4 + $0x68] sm:$0xff] %v1445
      %1462 = vst [vmem:[#allocation4 + $0x70] sm:$0xff] %v1446
      %1463 = vst [vmem:[#allocation4 + $0x78] sm:$0xff] %v1447
    $region45: #{tpu_custom_call.1} parent=1 // pred_fallthru
      _
    // Predicated region
    $region46: #{tpu_custom_call.1} parent=1 // pred_check
      _
    $region47: #{tpu_custom_call.1} parent=1 // pred_check_branch
      %1465 = sbr.rel (0) target = $region49
    $region48: #{tpu_custom_call.1} parent=1 // pred_region
      %1467 = vsyncadd [#allocation5], 0
      %s1468 = sshll.u32 [#allocation4], 4
      %s1469 = int_to_ptr.vmem [resolvable:$true] %s1468
      %s1470 = sshll.u32 %s4, 4
      %s1471 = int_to_ptr.hbm [resolvable:$true] %s1470
      %1476 = dma.vmem_to_hbm [thread:$0]  %s1469, 2048, %s1471, [#allocation5], 128, 128, 8
    $region49: #{tpu_custom_call.1} parent=1 // pred_fallthru
      _
    // Predicated region
    $region50: #{tpu_custom_call.1} parent=1 // pred_check
      _
    $region51: #{tpu_custom_call.1} parent=1 // pred_check_branch
      %1478 = sbr.rel (0) target = $region53
    $region52: #{tpu_custom_call.1} parent=1 // pred_region
      %1480 = dma.done [#allocation5], 2048
    $region53: #{tpu_custom_call.1} parent=1 // pred_fallthru
      _
    %1481 = vsyncpa [#allocation5], 1

</llo_original>
